<compile_context>
chip_gen: v7x
topology: tpu7x:2x2x1
jax: 0.10.0
libtpu: 0.0.40
codegen_flags: <defaults>
</compile_context>

<pallas_src>
import functools
import math

import jax
import jax.numpy as jnp
from jax import lax
from jax.experimental import pallas as pl
from jax.experimental.pallas import tpu as pltpu


def _mha_kernel(x_ref, wq_ref, wk_ref, wv_ref, wp_ref, bp_ref, o_ref,
                *, num_heads, scale):
    # x_ref : (1, T, d_in)       current batch element
    # wq/wk/wv_ref : (H, d_in, hd)   per-head QKV projection weights (already W^T)
    # wp_ref : (H, hd, d_out)        per-head slab of the output projection (W_proj^T)
    # bp_ref : (1, d_out)            output projection bias
    # o_ref  : (1, T, d_out)
    x = x_ref[0]                                   # (T, d_in)
    T = x.shape[0]
    d_out = o_ref.shape[-1]

    # Causal mask: position j > i is masked (same as triu(ones, diagonal=1)).
    row = lax.broadcasted_iota(jnp.int32, (T, T), 0)
    col = lax.broadcasted_iota(jnp.int32, (T, T), 1)
    causal = col > row

    acc = jnp.zeros((T, d_out), dtype=jnp.float32)
    for h in range(num_heads):                     # static unrolled loop, H is small
        q = jnp.dot(x, wq_ref[h], preferred_element_type=jnp.float32)   # (T, hd)
        k = jnp.dot(x, wk_ref[h], preferred_element_type=jnp.float32)   # (T, hd)
        v = jnp.dot(x, wv_ref[h], preferred_element_type=jnp.float32)   # (T, hd)

        s = jnp.dot(q, k.T, preferred_element_type=jnp.float32) * scale  # (T, T)
        s = jnp.where(causal, -jnp.inf, s)

        # Numerically-stable softmax along the key axis.
        s_max = jnp.max(s, axis=-1, keepdims=True)
        e = jnp.exp(s - s_max)
        p = e / jnp.sum(e, axis=-1, keepdims=True)

        ctx = jnp.dot(p, v, preferred_element_type=jnp.float32)          # (T, hd)
        # Output projection, accumulated head-by-head:
        #   out = sum_h ctx_h @ W_proj^T[h*hd:(h+1)*hd, :]
        acc = acc + jnp.dot(ctx, wp_ref[h], preferred_element_type=jnp.float32)

    o_ref[0] = (acc + bp_ref[...]).astype(o_ref.dtype)


def mask_multihead_attention(x, wq, wk, wv, wp, bp, *, num_heads):
    """x: (B, T, d_in); wq/wk/wv: (d_out, d_in) PyTorch-layout weights (no bias);
    wp: (d_out, d_out), bp: (d_out,). Returns (B, T, d_out)."""
    B, T, d_in = x.shape
    d_out = wq.shape[0]
    assert d_out % num_heads == 0, "d_out must be divisible by num_heads"
    hd = d_out // num_heads
    scale = 1.0 / math.sqrt(hd)

    # Pre-split weights per head at trace time (cheap, weights are small):
    #   Q = x @ W_Q^T  ->  per-head (d_in, hd) slabs stacked as (H, d_in, hd)
    wq_h = wq.T.reshape(d_in, num_heads, hd).transpose(1, 0, 2)
    wk_h = wk.T.reshape(d_in, num_heads, hd).transpose(1, 0, 2)
    wv_h = wv.T.reshape(d_in, num_heads, hd).transpose(1, 0, 2)
    #   out = ctx @ W_proj^T  with ctx rows grouped by head -> (H, hd, d_out)
    wp_h = wp.T.reshape(num_heads, hd, d_out)
    bp_2d = bp.reshape(1, d_out)

    kernel = functools.partial(_mha_kernel, num_heads=num_heads, scale=scale)

    return pl.pallas_call(
        kernel,
        out_shape=jax.ShapeDtypeStruct((B, T, d_out), x.dtype),
        grid_spec=pltpu.PrefetchScalarGridSpec(
            num_scalar_prefetch=0,
            grid=(B,),
            in_specs=[
                pl.BlockSpec((1, T, d_in), lambda b: (b, 0, 0)),
                pl.BlockSpec((num_heads, d_in, hd), lambda b: (0, 0, 0)),
                pl.BlockSpec((num_heads, d_in, hd), lambda b: (0, 0, 0)),
                pl.BlockSpec((num_heads, d_in, hd), lambda b: (0, 0, 0)),
                pl.BlockSpec((num_heads, hd, d_out), lambda b: (0, 0, 0)),
                pl.BlockSpec((1, d_out), lambda b: (0, 0)),
            ],
            out_specs=pl.BlockSpec((1, T, d_out), lambda b: (b, 0, 0)),
        ),
        compiler_params=pltpu.CompilerParams(
            dimension_semantics=("parallel",),
        ),
    )(x, wq_h, wk_h, wv_h, wp_h, bp_2d)


def mha_reference(x, wq, wk, wv, wp, bp, *, num_heads):
    """Pure-JAX mirror of the PyTorch forward (dropout is a no-op there)."""
    B, T, d_in = x.shape
    d_out = wq.shape[0]
    hd = d_out // num_heads
    Q = (x @ wq.T).reshape(B, T, num_heads, hd).transpose(0, 2, 1, 3)
    K = (x @ wk.T).reshape(B, T, num_heads, hd).transpose(0, 2, 1, 3)
    V = (x @ wv.T).reshape(B, T, num_heads, hd).transpose(0, 2, 1, 3)
    s = jnp.einsum('bhqd,bhkd->bhqk', Q, K)
    mask = jnp.triu(jnp.ones((T, T), dtype=bool), k=1)
    s = jnp.where(mask[None, None], -jnp.inf, s)
    w = jax.nn.softmax(s / math.sqrt(hd), axis=-1)
    ctx = jnp.einsum('bhqk,bhkd->bhqd', w, V).transpose(0, 2, 1, 3).reshape(B, T, d_out)
    return ctx @ wp.T + bp


if __name__ == "__main__":
    key = jax.random.PRNGKey(0)
    B, T, d_in, d_out, num_heads = 2, 8, 32, 32, 4

    k1, k2, k3, k4, k5, k6 = jax.random.split(key, 6)
    x = jax.random.normal(k1, (B, T, d_in), dtype=jnp.float32)
    wq = jax.random.normal(k2, (d_out, d_in), dtype=jnp.float32) * 0.1
    wk = jax.random.normal(k3, (d_out, d_in), dtype=jnp.float32) * 0.1
    wv = jax.random.normal(k4, (d_out, d_in), dtype=jnp.float32) * 0.1
    wp = jax.random.normal(k5, (d_out, d_out), dtype=jnp.float32) * 0.1
    bp = jax.random.normal(k6, (d_out,), dtype=jnp.float32) * 0.1

    out = mask_multihead_attention(x, wq, wk, wv, wp, bp, num_heads=num_heads)
    out = jax.block_until_ready(out)

    ref = mha_reference(x, wq, wk, wv, wp, bp, num_heads=num_heads)
    assert out.shape == (B, T, d_out) and out.dtype == x.dtype
    assert jnp.allclose(out, ref, atol=1e-4, rtol=1e-4), "mismatch vs reference"

    print("KERNEL_OK")
</pallas_src>

<mosaic_0001>
module attributes {stable_mosaic.version = 11 : i64} {
  func.func @_mha_kernel(%arg0: i32, %arg1: memref<1x8x32xf32, #tpu.memory_space<vmem>>, %arg2: memref<4x32x8xf32, #tpu.memory_space<vmem>>, %arg3: memref<4x32x8xf32, #tpu.memory_space<vmem>>, %arg4: memref<4x32x8xf32, #tpu.memory_space<vmem>>, %arg5: memref<4x8x32xf32, #tpu.memory_space<vmem>>, %arg6: memref<1x32xf32, #tpu.memory_space<vmem>>, %arg7: memref<1x8x32xf32, #tpu.memory_space<vmem>>) attributes {dimension_semantics = [#tpu.dimension_semantics<parallel>], iteration_bounds = array<i64: 2>, scalar_prefetch = 0 : i64, scratch_operands = 0 : i64, tpu.core_type = #tpu.core_type<tc>, window_params = [{transform_indices = @transform_0, window_bounds = array<i64: 1, 8, 32>}, {pipeline_mode = #tpu.pipeline_mode<synchronous>, transform_indices = @transform_1, window_bounds = array<i64: 4, 32, 8>}, {pipeline_mode = #tpu.pipeline_mode<synchronous>, transform_indices = @transform_2, window_bounds = array<i64: 4, 32, 8>}, {pipeline_mode = #tpu.pipeline_mode<synchronous>, transform_indices = @transform_3, window_bounds = array<i64: 4, 32, 8>}, {pipeline_mode = #tpu.pipeline_mode<synchronous>, transform_indices = @transform_4, window_bounds = array<i64: 4, 8, 32>}, {pipeline_mode = #tpu.pipeline_mode<synchronous>, transform_indices = @transform_5, window_bounds = array<i64: 1, 32>}, {transform_indices = @transform_6, window_bounds = array<i64: 1, 8, 32>}]} {
    %c0 = arith.constant 0 : index
    %c0_0 = arith.constant 0 : index
    %c0_1 = arith.constant 0 : index
    %0 = vector.load %arg1[%c0, %c0_0, %c0_1] : memref<1x8x32xf32, #tpu.memory_space<vmem>>, vector<1x8x32xf32>
    %1 = vector.shape_cast %0 : vector<1x8x32xf32> to vector<8x32xf32>
    %2 = tpu.iota {dimensions = array<i32: 0>} : vector<8x8xi32>
    %3 = tpu.iota {dimensions = array<i32: 1>} : vector<8x8xi32>
    %4 = arith.cmpi sgt, %3, %2 : vector<8x8xi32>
    %cst = arith.constant 0.000000e+00 : f32
    %5 = vector.broadcast %cst : f32 to vector<8x32xf32>
    %c0_2 = arith.constant 0 : index
    %c0_3 = arith.constant 0 : index
    %c0_4 = arith.constant 0 : index
    %6 = vector.load %arg2[%c0_2, %c0_3, %c0_4] : memref<4x32x8xf32, #tpu.memory_space<vmem>>, vector<1x32x8xf32>
    %7 = vector.shape_cast %6 : vector<1x32x8xf32> to vector<32x8xf32>
    %cst_5 = arith.constant dense<0.000000e+00> : vector<8x8xf32>
    %8 = tpu.matmul %1, %7, %cst_5 {dimension_numbers = #tpu.dot_dimension_numbers<[1], [0], [0], [1], [0, 0, 1, 1], [], []>} : vector<8x32xf32>, vector<32x8xf32>, vector<8x8xf32> -> vector<8x8xf32>
    %c0_6 = arith.constant 0 : index
    %c0_7 = arith.constant 0 : index
    %c0_8 = arith.constant 0 : index
    %9 = vector.load %arg3[%c0_6, %c0_7, %c0_8] : memref<4x32x8xf32, #tpu.memory_space<vmem>>, vector<1x32x8xf32>
    %10 = vector.shape_cast %9 : vector<1x32x8xf32> to vector<32x8xf32>
    %cst_9 = arith.constant dense<0.000000e+00> : vector<8x8xf32>
    %11 = tpu.matmul %1, %10, %cst_9 {dimension_numbers = #tpu.dot_dimension_numbers<[1], [0], [0], [1], [0, 0, 1, 1], [], []>} : vector<8x32xf32>, vector<32x8xf32>, vector<8x8xf32> -> vector<8x8xf32>
    %c0_10 = arith.constant 0 : index
    %c0_11 = arith.constant 0 : index
    %c0_12 = arith.constant 0 : index
    %12 = vector.load %arg4[%c0_10, %c0_11, %c0_12] : memref<4x32x8xf32, #tpu.memory_space<vmem>>, vector<1x32x8xf32>
    %13 = vector.shape_cast %12 : vector<1x32x8xf32> to vector<32x8xf32>
    %cst_13 = arith.constant dense<0.000000e+00> : vector<8x8xf32>
    %14 = tpu.matmul %1, %13, %cst_13 {dimension_numbers = #tpu.dot_dimension_numbers<[1], [0], [0], [1], [0, 0, 1, 1], [], []>} : vector<8x32xf32>, vector<32x8xf32>, vector<8x8xf32> -> vector<8x8xf32>
    %15 = tpu.transpose %11, [1, 0] : vector<8x8xf32> -> vector<8x8xf32>
    %cst_14 = arith.constant dense<0.000000e+00> : vector<8x8xf32>
    %16 = tpu.matmul %8, %15, %cst_14 {dimension_numbers = #tpu.dot_dimension_numbers<[1], [0], [0], [1], [0, 0, 1, 1], [], []>} : vector<8x8xf32>, vector<8x8xf32>, vector<8x8xf32> -> vector<8x8xf32>
    %cst_15 = arith.constant 0.353553385 : f32
    %17 = vector.broadcast %cst_15 : f32 to vector<8x8xf32>
    %18 = arith.mulf %16, %17 : vector<8x8xf32>
    %cst_16 = arith.constant 0xFF800000 : f32
    %19 = vector.broadcast %cst_16 : f32 to vector<8x8xf32>
    %20 = arith.select %4, %19, %18 : vector<8x8xi1>, vector<8x8xf32>
    %cst_17 = arith.constant dense<0xFF800000> : vector<8xf32>
    %21 = vector.multi_reduction <maximumf>, %20, %cst_17 [1] : vector<8x8xf32> to vector<8xf32>
    %22 = vector.shape_cast %21 : vector<8xf32> to vector<8x1xf32>
    %23 = vector.broadcast %22 : vector<8x1xf32> to vector<8x8xf32>
    %24 = arith.subf %20, %23 : vector<8x8xf32>
    %25 = math.exp %24 : vector<8x8xf32>
    %cst_18 = arith.constant dense<0.000000e+00> : vector<8xf32>
    %26 = vector.multi_reduction <add>, %25, %cst_18 [1] : vector<8x8xf32> to vector<8xf32>
    %27 = vector.shape_cast %26 : vector<8xf32> to vector<8x1xf32>
    %28 = vector.broadcast %27 : vector<8x1xf32> to vector<8x8xf32>
    %29 = arith.divf %25, %28 : vector<8x8xf32>
    %cst_19 = arith.constant dense<0.000000e+00> : vector<8x8xf32>
    %30 = tpu.matmul %29, %14, %cst_19 {dimension_numbers = #tpu.dot_dimension_numbers<[1], [0], [0], [1], [0, 0, 1, 1], [], []>} : vector<8x8xf32>, vector<8x8xf32>, vector<8x8xf32> -> vector<8x8xf32>
    %c0_20 = arith.constant 0 : index
    %c0_21 = arith.constant 0 : index
    %c0_22 = arith.constant 0 : index
    %31 = vector.load %arg5[%c0_20, %c0_21, %c0_22] : memref<4x8x32xf32, #tpu.memory_space<vmem>>, vector<1x8x32xf32>
    %32 = vector.shape_cast %31 : vector<1x8x32xf32> to vector<8x32xf32>
    %cst_23 = arith.constant dense<0.000000e+00> : vector<8x32xf32>
    %33 = tpu.matmul %30, %32, %cst_23 {dimension_numbers = #tpu.dot_dimension_numbers<[1], [0], [0], [1], [0, 0, 1, 1], [], []>} : vector<8x8xf32>, vector<8x32xf32>, vector<8x32xf32> -> vector<8x32xf32>
    %34 = arith.addf %5, %33 : vector<8x32xf32>
    %c1 = arith.constant 1 : index
    %c0_24 = arith.constant 0 : index
    %c0_25 = arith.constant 0 : index
    %35 = vector.load %arg2[%c1, %c0_24, %c0_25] : memref<4x32x8xf32, #tpu.memory_space<vmem>>, vector<1x32x8xf32>
    %36 = vector.shape_cast %35 : vector<1x32x8xf32> to vector<32x8xf32>
    %cst_26 = arith.constant dense<0.000000e+00> : vector<8x8xf32>
    %37 = tpu.matmul %1, %36, %cst_26 {dimension_numbers = #tpu.dot_dimension_numbers<[1], [0], [0], [1], [0, 0, 1, 1], [], []>} : vector<8x32xf32>, vector<32x8xf32>, vector<8x8xf32> -> vector<8x8xf32>
    %c1_27 = arith.constant 1 : index
    %c0_28 = arith.constant 0 : index
    %c0_29 = arith.constant 0 : index
    %38 = vector.load %arg3[%c1_27, %c0_28, %c0_29] : memref<4x32x8xf32, #tpu.memory_space<vmem>>, vector<1x32x8xf32>
    %39 = vector.shape_cast %38 : vector<1x32x8xf32> to vector<32x8xf32>
    %cst_30 = arith.constant dense<0.000000e+00> : vector<8x8xf32>
    %40 = tpu.matmul %1, %39, %cst_30 {dimension_numbers = #tpu.dot_dimension_numbers<[1], [0], [0], [1], [0, 0, 1, 1], [], []>} : vector<8x32xf32>, vector<32x8xf32>, vector<8x8xf32> -> vector<8x8xf32>
    %c1_31 = arith.constant 1 : index
    %c0_32 = arith.constant 0 : index
    %c0_33 = arith.constant 0 : index
    %41 = vector.load %arg4[%c1_31, %c0_32, %c0_33] : memref<4x32x8xf32, #tpu.memory_space<vmem>>, vector<1x32x8xf32>
    %42 = vector.shape_cast %41 : vector<1x32x8xf32> to vector<32x8xf32>
    %cst_34 = arith.constant dense<0.000000e+00> : vector<8x8xf32>
    %43 = tpu.matmul %1, %42, %cst_34 {dimension_numbers = #tpu.dot_dimension_numbers<[1], [0], [0], [1], [0, 0, 1, 1], [], []>} : vector<8x32xf32>, vector<32x8xf32>, vector<8x8xf32> -> vector<8x8xf32>
    %44 = tpu.transpose %40, [1, 0] : vector<8x8xf32> -> vector<8x8xf32>
    %cst_35 = arith.constant dense<0.000000e+00> : vector<8x8xf32>
    %45 = tpu.matmul %37, %44, %cst_35 {dimension_numbers = #tpu.dot_dimension_numbers<[1], [0], [0], [1], [0, 0, 1, 1], [], []>} : vector<8x8xf32>, vector<8x8xf32>, vector<8x8xf32> -> vector<8x8xf32>
    %cst_36 = arith.constant 0.353553385 : f32
    %46 = vector.broadcast %cst_36 : f32 to vector<8x8xf32>
    %47 = arith.mulf %45, %46 : vector<8x8xf32>
    %cst_37 = arith.constant 0xFF800000 : f32
    %48 = vector.broadcast %cst_37 : f32 to vector<8x8xf32>
    %49 = arith.select %4, %48, %47 : vector<8x8xi1>, vector<8x8xf32>
    %cst_38 = arith.constant dense<0xFF800000> : vector<8xf32>
    %50 = vector.multi_reduction <maximumf>, %49, %cst_38 [1] : vector<8x8xf32> to vector<8xf32>
    %51 = vector.shape_cast %50 : vector<8xf32> to vector<8x1xf32>
    %52 = vector.broadcast %51 : vector<8x1xf32> to vector<8x8xf32>
    %53 = arith.subf %49, %52 : vector<8x8xf32>
    %54 = math.exp %53 : vector<8x8xf32>
    %cst_39 = arith.constant dense<0.000000e+00> : vector<8xf32>
    %55 = vector.multi_reduction <add>, %54, %cst_39 [1] : vector<8x8xf32> to vector<8xf32>
    %56 = vector.shape_cast %55 : vector<8xf32> to vector<8x1xf32>
    %57 = vector.broadcast %56 : vector<8x1xf32> to vector<8x8xf32>
    %58 = arith.divf %54, %57 : vector<8x8xf32>
    %cst_40 = arith.constant dense<0.000000e+00> : vector<8x8xf32>
    %59 = tpu.matmul %58, %43, %cst_40 {dimension_numbers = #tpu.dot_dimension_numbers<[1], [0], [0], [1], [0, 0, 1, 1], [], []>} : vector<8x8xf32>, vector<8x8xf32>, vector<8x8xf32> -> vector<8x8xf32>
    %c1_41 = arith.constant 1 : index
    %c0_42 = arith.constant 0 : index
    %c0_43 = arith.constant 0 : index
    %60 = vector.load %arg5[%c1_41, %c0_42, %c0_43] : memref<4x8x32xf32, #tpu.memory_space<vmem>>, vector<1x8x32xf32>
    %61 = vector.shape_cast %60 : vector<1x8x32xf32> to vector<8x32xf32>
    %cst_44 = arith.constant dense<0.000000e+00> : vector<8x32xf32>
    %62 = tpu.matmul %59, %61, %cst_44 {dimension_numbers = #tpu.dot_dimension_numbers<[1], [0], [0], [1], [0, 0, 1, 1], [], []>} : vector<8x8xf32>, vector<8x32xf32>, vector<8x32xf32> -> vector<8x32xf32>
    %63 = arith.addf %34, %62 : vector<8x32xf32>
    %c2 = arith.constant 2 : index
    %c0_45 = arith.constant 0 : index
    %c0_46 = arith.constant 0 : index
    %64 = vector.load %arg2[%c2, %c0_45, %c0_46] : memref<4x32x8xf32, #tpu.memory_space<vmem>>, vector<1x32x8xf32>
    %65 = vector.shape_cast %64 : vector<1x32x8xf32> to vector<32x8xf32>
    %cst_47 = arith.constant dense<0.000000e+00> : vector<8x8xf32>
    %66 = tpu.matmul %1, %65, %cst_47 {dimension_numbers = #tpu.dot_dimension_numbers<[1], [0], [0], [1], [0, 0, 1, 1], [], []>} : vector<8x32xf32>, vector<32x8xf32>, vector<8x8xf32> -> vector<8x8xf32>
    %c2_48 = arith.constant 2 : index
    %c0_49 = arith.constant 0 : index
    %c0_50 = arith.constant 0 : index
    %67 = vector.load %arg3[%c2_48, %c0_49, %c0_50] : memref<4x32x8xf32, #tpu.memory_space<vmem>>, vector<1x32x8xf32>
    %68 = vector.shape_cast %67 : vector<1x32x8xf32> to vector<32x8xf32>
    %cst_51 = arith.constant dense<0.000000e+00> : vector<8x8xf32>
    %69 = tpu.matmul %1, %68, %cst_51 {dimension_numbers = #tpu.dot_dimension_numbers<[1], [0], [0], [1], [0, 0, 1, 1], [], []>} : vector<8x32xf32>, vector<32x8xf32>, vector<8x8xf32> -> vector<8x8xf32>
    %c2_52 = arith.constant 2 : index
    %c0_53 = arith.constant 0 : index
    %c0_54 = arith.constant 0 : index
    %70 = vector.load %arg4[%c2_52, %c0_53, %c0_54] : memref<4x32x8xf32, #tpu.memory_space<vmem>>, vector<1x32x8xf32>
    %71 = vector.shape_cast %70 : vector<1x32x8xf32> to vector<32x8xf32>
    %cst_55 = arith.constant dense<0.000000e+00> : vector<8x8xf32>
    %72 = tpu.matmul %1, %71, %cst_55 {dimension_numbers = #tpu.dot_dimension_numbers<[1], [0], [0], [1], [0, 0, 1, 1], [], []>} : vector<8x32xf32>, vector<32x8xf32>, vector<8x8xf32> -> vector<8x8xf32>
    %73 = tpu.transpose %69, [1, 0] : vector<8x8xf32> -> vector<8x8xf32>
    %cst_56 = arith.constant dense<0.000000e+00> : vector<8x8xf32>
    %74 = tpu.matmul %66, %73, %cst_56 {dimension_numbers = #tpu.dot_dimension_numbers<[1], [0], [0], [1], [0, 0, 1, 1], [], []>} : vector<8x8xf32>, vector<8x8xf32>, vector<8x8xf32> -> vector<8x8xf32>
    %cst_57 = arith.constant 0.353553385 : f32
    %75 = vector.broadcast %cst_57 : f32 to vector<8x8xf32>
    %76 = arith.mulf %74, %75 : vector<8x8xf32>
    %cst_58 = arith.constant 0xFF800000 : f32
    %77 = vector.broadcast %cst_58 : f32 to vector<8x8xf32>
    %78 = arith.select %4, %77, %76 : vector<8x8xi1>, vector<8x8xf32>
    %cst_59 = arith.constant dense<0xFF800000> : vector<8xf32>
    %79 = vector.multi_reduction <maximumf>, %78, %cst_59 [1] : vector<8x8xf32> to vector<8xf32>
    %80 = vector.shape_cast %79 : vector<8xf32> to vector<8x1xf32>
    %81 = vector.broadcast %80 : vector<8x1xf32> to vector<8x8xf32>
    %82 = arith.subf %78, %81 : vector<8x8xf32>
    %83 = math.exp %82 : vector<8x8xf32>
    %cst_60 = arith.constant dense<0.000000e+00> : vector<8xf32>
    %84 = vector.multi_reduction <add>, %83, %cst_60 [1] : vector<8x8xf32> to vector<8xf32>
    %85 = vector.shape_cast %84 : vector<8xf32> to vector<8x1xf32>
    %86 = vector.broadcast %85 : vector<8x1xf32> to vector<8x8xf32>
    %87 = arith.divf %83, %86 : vector<8x8xf32>
    %cst_61 = arith.constant dense<0.000000e+00> : vector<8x8xf32>
    %88 = tpu.matmul %87, %72, %cst_61 {dimension_numbers = #tpu.dot_dimension_numbers<[1], [0], [0], [1], [0, 0, 1, 1], [], []>} : vector<8x8xf32>, vector<8x8xf32>, vector<8x8xf32> -> vector<8x8xf32>
    %c2_62 = arith.constant 2 : index
    %c0_63 = arith.constant 0 : index
    %c0_64 = arith.constant 0 : index
    %89 = vector.load %arg5[%c2_62, %c0_63, %c0_64] : memref<4x8x32xf32, #tpu.memory_space<vmem>>, vector<1x8x32xf32>
    %90 = vector.shape_cast %89 : vector<1x8x32xf32> to vector<8x32xf32>
    %cst_65 = arith.constant dense<0.000000e+00> : vector<8x32xf32>
    %91 = tpu.matmul %88, %90, %cst_65 {dimension_numbers = #tpu.dot_dimension_numbers<[1], [0], [0], [1], [0, 0, 1, 1], [], []>} : vector<8x8xf32>, vector<8x32xf32>, vector<8x32xf32> -> vector<8x32xf32>
    %92 = arith.addf %63, %91 : vector<8x32xf32>
    %c3 = arith.constant 3 : index
    %c0_66 = arith.constant 0 : index
    %c0_67 = arith.constant 0 : index
    %93 = vector.load %arg2[%c3, %c0_66, %c0_67] : memref<4x32x8xf32, #tpu.memory_space<vmem>>, vector<1x32x8xf32>
    %94 = vector.shape_cast %93 : vector<1x32x8xf32> to vector<32x8xf32>
    %cst_68 = arith.constant dense<0.000000e+00> : vector<8x8xf32>
    %95 = tpu.matmul %1, %94, %cst_68 {dimension_numbers = #tpu.dot_dimension_numbers<[1], [0], [0], [1], [0, 0, 1, 1], [], []>} : vector<8x32xf32>, vector<32x8xf32>, vector<8x8xf32> -> vector<8x8xf32>
    %c3_69 = arith.constant 3 : index
    %c0_70 = arith.constant 0 : index
    %c0_71 = arith.constant 0 : index
    %96 = vector.load %arg3[%c3_69, %c0_70, %c0_71] : memref<4x32x8xf32, #tpu.memory_space<vmem>>, vector<1x32x8xf32>
    %97 = vector.shape_cast %96 : vector<1x32x8xf32> to vector<32x8xf32>
    %cst_72 = arith.constant dense<0.000000e+00> : vector<8x8xf32>
    %98 = tpu.matmul %1, %97, %cst_72 {dimension_numbers = #tpu.dot_dimension_numbers<[1], [0], [0], [1], [0, 0, 1, 1], [], []>} : vector<8x32xf32>, vector<32x8xf32>, vector<8x8xf32> -> vector<8x8xf32>
    %c3_73 = arith.constant 3 : index
    %c0_74 = arith.constant 0 : index
    %c0_75 = arith.constant 0 : index
    %99 = vector.load %arg4[%c3_73, %c0_74, %c0_75] : memref<4x32x8xf32, #tpu.memory_space<vmem>>, vector<1x32x8xf32>
    %100 = vector.shape_cast %99 : vector<1x32x8xf32> to vector<32x8xf32>
    %cst_76 = arith.constant dense<0.000000e+00> : vector<8x8xf32>
    %101 = tpu.matmul %1, %100, %cst_76 {dimension_numbers = #tpu.dot_dimension_numbers<[1], [0], [0], [1], [0, 0, 1, 1], [], []>} : vector<8x32xf32>, vector<32x8xf32>, vector<8x8xf32> -> vector<8x8xf32>
    %102 = tpu.transpose %98, [1, 0] : vector<8x8xf32> -> vector<8x8xf32>
    %cst_77 = arith.constant dense<0.000000e+00> : vector<8x8xf32>
    %103 = tpu.matmul %95, %102, %cst_77 {dimension_numbers = #tpu.dot_dimension_numbers<[1], [0], [0], [1], [0, 0, 1, 1], [], []>} : vector<8x8xf32>, vector<8x8xf32>, vector<8x8xf32> -> vector<8x8xf32>
    %cst_78 = arith.constant 0.353553385 : f32
    %104 = vector.broadcast %cst_78 : f32 to vector<8x8xf32>
    %105 = arith.mulf %103, %104 : vector<8x8xf32>
    %cst_79 = arith.constant 0xFF800000 : f32
    %106 = vector.broadcast %cst_79 : f32 to vector<8x8xf32>
    %107 = arith.select %4, %106, %105 : vector<8x8xi1>, vector<8x8xf32>
    %cst_80 = arith.constant dense<0xFF800000> : vector<8xf32>
    %108 = vector.multi_reduction <maximumf>, %107, %cst_80 [1] : vector<8x8xf32> to vector<8xf32>
    %109 = vector.shape_cast %108 : vector<8xf32> to vector<8x1xf32>
    %110 = vector.broadcast %109 : vector<8x1xf32> to vector<8x8xf32>
    %111 = arith.subf %107, %110 : vector<8x8xf32>
    %112 = math.exp %111 : vector<8x8xf32>
    %cst_81 = arith.constant dense<0.000000e+00> : vector<8xf32>
    %113 = vector.multi_reduction <add>, %112, %cst_81 [1] : vector<8x8xf32> to vector<8xf32>
    %114 = vector.shape_cast %113 : vector<8xf32> to vector<8x1xf32>
    %115 = vector.broadcast %114 : vector<8x1xf32> to vector<8x8xf32>
    %116 = arith.divf %112, %115 : vector<8x8xf32>
    %cst_82 = arith.constant dense<0.000000e+00> : vector<8x8xf32>
    %117 = tpu.matmul %116, %101, %cst_82 {dimension_numbers = #tpu.dot_dimension_numbers<[1], [0], [0], [1], [0, 0, 1, 1], [], []>} : vector<8x8xf32>, vector<8x8xf32>, vector<8x8xf32> -> vector<8x8xf32>
    %c3_83 = arith.constant 3 : index
    %c0_84 = arith.constant 0 : index
    %c0_85 = arith.constant 0 : index
    %118 = vector.load %arg5[%c3_83, %c0_84, %c0_85] : memref<4x8x32xf32, #tpu.memory_space<vmem>>, vector<1x8x32xf32>
    %119 = vector.shape_cast %118 : vector<1x8x32xf32> to vector<8x32xf32>
    %cst_86 = arith.constant dense<0.000000e+00> : vector<8x32xf32>
    %120 = tpu.matmul %117, %119, %cst_86 {dimension_numbers = #tpu.dot_dimension_numbers<[1], [0], [0], [1], [0, 0, 1, 1], [], []>} : vector<8x8xf32>, vector<8x32xf32>, vector<8x32xf32> -> vector<8x32xf32>
    %121 = arith.addf %92, %120 : vector<8x32xf32>
    %c0_87 = arith.constant 0 : index
    %c0_88 = arith.constant 0 : index
    %122 = vector.load %arg6[%c0_87, %c0_88] : memref<1x32xf32, #tpu.memory_space<vmem>>, vector<1x32xf32>
    %123 = vector.broadcast %122 : vector<1x32xf32> to vector<8x32xf32>
    %124 = arith.addf %121, %123 : vector<8x32xf32>
    %c0_89 = arith.constant 0 : index
    %c0_90 = arith.constant 0 : index
    %c0_91 = arith.constant 0 : index
    %125 = vector.load %arg7[%c0_89, %c0_90, %c0_91] : memref<1x8x32xf32, #tpu.memory_space<vmem>>, vector<1x8x32xf32>
    %126 = vector.shape_cast %125 : vector<1x8x32xf32> to vector<8x32xf32>
    %127 = vector.shape_cast %124 : vector<8x32xf32> to vector<1x8x32xf32>
    tpu.vector_store %arg7[%c0_89, %c0_90, %c0_91], %127 {strides = array<i32>} : memref<1x8x32xf32, #tpu.memory_space<vmem>>, vector<1x8x32xf32>,
    return
  }
  func.func @transform_0(%arg0: i32) -> (i32, i32, i32) {
    %c0_i32 = arith.constant 0 : i32
    %c0_i32_0 = arith.constant 0 : i32
    %c0_i32_1 = arith.constant 0 : i32
    return %arg0, %c0_i32, %c0_i32_0 : i32, i32, i32
  }
  func.func @transform_1(%arg0: i32) -> (i32, i32, i32) {
    %c0_i32 = arith.constant 0 : i32
    %c0_i32_0 = arith.constant 0 : i32
    %c0_i32_1 = arith.constant 0 : i32
    %c0_i32_2 = arith.constant 0 : i32
    return %c0_i32, %c0_i32_0, %c0_i32_1 : i32, i32, i32
  }
  func.func @transform_2(%arg0: i32) -> (i32, i32, i32) {
    %c0_i32 = arith.constant 0 : i32
    %c0_i32_0 = arith.constant 0 : i32
    %c0_i32_1 = arith.constant 0 : i32
    %c0_i32_2 = arith.constant 0 : i32
    return %c0_i32, %c0_i32_0, %c0_i32_1 : i32, i32, i32
  }
  func.func @transform_3(%arg0: i32) -> (i32, i32, i32) {
    %c0_i32 = arith.constant 0 : i32
    %c0_i32_0 = arith.constant 0 : i32
    %c0_i32_1 = arith.constant 0 : i32
    %c0_i32_2 = arith.constant 0 : i32
    return %c0_i32, %c0_i32_0, %c0_i32_1 : i32, i32, i32
  }
  func.func @transform_4(%arg0: i32) -> (i32, i32, i32) {
    %c0_i32 = arith.constant 0 : i32
    %c0_i32_0 = arith.constant 0 : i32
    %c0_i32_1 = arith.constant 0 : i32
    %c0_i32_2 = arith.constant 0 : i32
    return %c0_i32, %c0_i32_0, %c0_i32_1 : i32, i32, i32
  }
  func.func @transform_5(%arg0: i32) -> (i32, i32) {
    %c0_i32 = arith.constant 0 : i32
    %c0_i32_0 = arith.constant 0 : i32
    %c0_i32_1 = arith.constant 0 : i32
    return %c0_i32, %c0_i32_0 : i32, i32
  }
  func.func @transform_6(%arg0: i32) -> (i32, i32, i32) {
    %c0_i32 = arith.constant 0 : i32
    %c0_i32_0 = arith.constant 0 : i32
    %c0_i32_1 = arith.constant 0 : i32
    return %arg0, %c0_i32, %c0_i32_0 : i32, i32, i32
  }
}

</mosaic_0001>

<llo_original>
// kernel: tpu_custom_call.1
$region0: #{tpu_custom_call.1}
  #allocation0 [shape = 'u32[]', space=smem, size = 0x4, offset = 0x4, fixed_abs, tag = 'smem constant byte address 0x4 - core index']
  #allocation1 [shape = 'u32[144,128]{1,0:T(1,128)}', space=vmem, size = 0x12000, scoped, tag = 'internal scratch']
  %s0 = inlined_call_operand.vmem [shape: f32[2,8,32], index: 0, kind: input, shape index: {}]
  %s1 = inlined_call_operand.vmem [shape: f32[4,32,8], index: 1, kind: input, shape index: {}]
  %s2 = inlined_call_operand.vmem [shape: f32[4,32,8], index: 2, kind: input, shape index: {}]
  %s3 = inlined_call_operand.vmem [shape: f32[4,32,8], index: 3, kind: input, shape index: {}]
  %s4 = inlined_call_operand.vmem [shape: f32[4,8,32], index: 4, kind: input, shape index: {}]
  %s5 = inlined_call_operand.vmem [shape: f32[1,32], index: 5, kind: input, shape index: {}]
  %s6 = inlined_call_operand.hbm [shape: f32[2,8,32], index: 6, kind: output, shape index: {}]
  %s7 = sld [smem:[#allocation0]]
  $region57: #{tpu_custom_call.1} parent=0
    _
  %s9 = ssub.s32 1, %s7
  %s10 = scalar_select 0, %s9, %s7
  $region1: #{tpu_custom_call.1} parent=0
    #allocation2 [shape = 'u8[8192]{0}', space=vmem, size = 0x2000, scoped, tag = 'output window, operand 0']
    #allocation3 [shape = 's32[2]{0}', space=sflag, size = 0x8, scoped, tag = 'scoped memory for tpu_custom_call.1']
    %11 = vsyncpa [#allocation3], 0
    %s12 = scalar_lea.sflag [#allocation3], 1
    %13 = vsyncpa %s12, 0
    loop: start=0, step=1, limit=4
    $region2: #{tpu_custom_call.1} parent=1 // loop_pre_header
      _
    $region3: #{tpu_custom_call.1} parent=1 // loop_header
      %s15 = sphi 0, %s19
      %p16 = scmp.ge.s32.totalorder %s15, 4
      %s25 = sphi 0, %s27
      %s28 = sphi 0, %s25
      %s29 = sphi 0, %s28
      %s45 = sphi 0, %s29
      %s49 = sphi 0, %s49
      %s51 = sphi 0, %s49
      %s52 = sphi 0, %s51
      %s66 = sphi 0, %s52
      %s70 = sphi 0, %s70
      %s72 = sphi 0, %s70
      %s73 = sphi 0, %s72
      %s87 = sphi 0, %s73
      %s91 = sphi 0, %s91
      %s93 = sphi 0, %s91
      %s94 = sphi 0, %s93
      %s108 = sphi 0, %s94
      %s112 = sphi 0, %s112
      %s114 = sphi 0, %s112
      %s115 = sphi 0, %s114
      %s129 = sphi 0, %s115
      %s133 = sphi 0, %s133
      %s135 = sphi 0, %s133
      %s136 = sphi 0, %s135
      %s150 = sphi 0, %s136
      %s156 = sphi 0, %s158
      %s159 = sphi 0, %s156
      %s160 = sphi 0, %s159
      %s176 = sphi 0, %s160
    $region4: #{tpu_custom_call.1} parent=1 // loop_header_branch
      %18 = sbr.rel (%p16) target = $region8
    $region5: #{tpu_custom_call.1} parent=1 // loop_body
      %s20 = ssub.s32 %s15, 1
      %s21 = ssub.s32 %s15, 2
      %s22 = sadd.s32 %s15, 1
      %s23 = ssub.s32 %s15, %s22
      %p24 = scmp.eq.s32.totalorder %s23, 0
      %s26 = sadd.s32 %s25, 1
      %s27 = scalar_select %p24, %s25, %s26
      %p30 = pneg %p24
      %p31 = scmp.eq.s32.totalorder %s15, 1
      %p32 = por %p30, %p31
      %p33 = scmp.ne.s32.totalorder %s25, %s28
      %p34 = scmp.eq.s32.totalorder %s15, 0
      %p35 = por %p33, %p34
      %p36 = scmp.ne.s32.totalorder %s25, %s28
      %p37 = scmp.eq.s32.totalorder %s20, 1
      %p38 = por %p36, %p37
      %p39 = scmp.ne.s32.totalorder %s28, %s29
      %p40 = scmp.eq.s32.totalorder %s20, 0
      %p41 = por %p39, %p40
      %p42 = scmp.ne.s32.totalorder %s28, %s29
      %p43 = scmp.eq.s32.totalorder %s21, 1
      %p44 = por %p42, %p43
      %p46 = scmp.ne.s32.totalorder %s29, %s45
      %p47 = scmp.eq.s32.totalorder %s21, 0
      %p48 = por %p46, %p47
      %s50 = sadd.s32 %s49, 1
      %p53 = scmp.eq.s32.totalorder %s15, 1
      %p54 = scmp.ne.s32.totalorder %s49, %s51
      %p55 = scmp.eq.s32.totalorder %s15, 0
      %p56 = por %p54, %p55
      %p57 = scmp.ne.s32.totalorder %s49, %s51
      %p58 = scmp.eq.s32.totalorder %s20, 1
      %p59 = por %p57, %p58
      %p60 = scmp.ne.s32.totalorder %s51, %s52
      %p61 = scmp.eq.s32.totalorder %s20, 0
      %p62 = por %p60, %p61
      %p63 = scmp.ne.s32.totalorder %s51, %s52
      %p64 = scmp.eq.s32.totalorder %s21, 1
      %p65 = por %p63, %p64
      %p67 = scmp.ne.s32.totalorder %s52, %s66
      %p68 = scmp.eq.s32.totalorder %s21, 0
      %p69 = por %p67, %p68
      %s71 = sadd.s32 %s70, 1
      %p74 = scmp.eq.s32.totalorder %s15, 1
      %p75 = scmp.ne.s32.totalorder %s70, %s72
      %p76 = scmp.eq.s32.totalorder %s15, 0
      %p77 = por %p75, %p76
      %p78 = scmp.ne.s32.totalorder %s70, %s72
      %p79 = scmp.eq.s32.totalorder %s20, 1
      %p80 = por %p78, %p79
      %p81 = scmp.ne.s32.totalorder %s72, %s73
      %p82 = scmp.eq.s32.totalorder %s20, 0
      %p83 = por %p81, %p82
      %p84 = scmp.ne.s32.totalorder %s72, %s73
      %p85 = scmp.eq.s32.totalorder %s21, 1
      %p86 = por %p84, %p85
      %p88 = scmp.ne.s32.totalorder %s73, %s87
      %p89 = scmp.eq.s32.totalorder %s21, 0
      %p90 = por %p88, %p89
      %s92 = sadd.s32 %s91, 1
      %p95 = scmp.eq.s32.totalorder %s15, 1
      %p96 = scmp.ne.s32.totalorder %s91, %s93
      %p97 = scmp.eq.s32.totalorder %s15, 0
      %p98 = por %p96, %p97
      %p99 = scmp.ne.s32.totalorder %s91, %s93
      %p100 = scmp.eq.s32.totalorder %s20, 1
      %p101 = por %p99, %p100
      %p102 = scmp.ne.s32.totalorder %s93, %s94
      %p103 = scmp.eq.s32.totalorder %s20, 0
      %p104 = por %p102, %p103
      %p105 = scmp.ne.s32.totalorder %s93, %s94
      %p106 = scmp.eq.s32.totalorder %s21, 1
      %p107 = por %p105, %p106
      %p109 = scmp.ne.s32.totalorder %s94, %s108
      %p110 = scmp.eq.s32.totalorder %s21, 0
      %p111 = por %p109, %p110
      %s113 = sadd.s32 %s112, 1
      %p116 = scmp.eq.s32.totalorder %s15, 1
      %p117 = scmp.ne.s32.totalorder %s112, %s114
      %p118 = scmp.eq.s32.totalorder %s15, 0
      %p119 = por %p117, %p118
      %p120 = scmp.ne.s32.totalorder %s112, %s114
      %p121 = scmp.eq.s32.totalorder %s20, 1
      %p122 = por %p120, %p121
      %p123 = scmp.ne.s32.totalorder %s114, %s115
      %p124 = scmp.eq.s32.totalorder %s20, 0
      %p125 = por %p123, %p124
      %p126 = scmp.ne.s32.totalorder %s114, %s115
      %p127 = scmp.eq.s32.totalorder %s21, 1
      %p128 = por %p126, %p127
      %p130 = scmp.ne.s32.totalorder %s115, %s129
      %p131 = scmp.eq.s32.totalorder %s21, 0
      %p132 = por %p130, %p131
      %s134 = sadd.s32 %s133, 1
      %p137 = scmp.eq.s32.totalorder %s15, 1
      %p138 = scmp.ne.s32.totalorder %s133, %s135
      %p139 = scmp.eq.s32.totalorder %s15, 0
      %p140 = por %p138, %p139
      %p141 = scmp.ne.s32.totalorder %s133, %s135
      %p142 = scmp.eq.s32.totalorder %s20, 1
      %p143 = por %p141, %p142
      %p144 = scmp.ne.s32.totalorder %s135, %s136
      %p145 = scmp.eq.s32.totalorder %s20, 0
      %p146 = por %p144, %p145
      %p147 = scmp.ne.s32.totalorder %s135, %s136
      %p148 = scmp.eq.s32.totalorder %s21, 1
      %p149 = por %p147, %p148
      %p151 = scmp.ne.s32.totalorder %s136, %s150
      %p152 = scmp.eq.s32.totalorder %s21, 0
      %p153 = por %p151, %p152
      %s154 = ssub.s32 %s15, %s22
      %p155 = scmp.eq.s32.totalorder %s154, 0
      %s157 = sadd.s32 %s156, 1
      %s158 = scalar_select %p155, %s156, %s157
      %p161 = pneg %p155
      %p162 = scmp.eq.s32.totalorder %s15, 1
      %p163 = por %p161, %p162
      %p164 = scmp.ne.s32.totalorder %s156, %s159
      %p165 = scmp.eq.s32.totalorder %s15, 0
      %p166 = por %p164, %p165
      %p167 = scmp.ne.s32.totalorder %s156, %s159
      %p168 = scmp.eq.s32.totalorder %s20, 1
      %p169 = por %p167, %p168
      %p170 = scmp.ne.s32.totalorder %s159, %s160
      %p171 = scmp.eq.s32.totalorder %s20, 0
      %p172 = por %p170, %p171
      %p173 = scmp.ne.s32.totalorder %s159, %s160
      %p174 = scmp.eq.s32.totalorder %s21, 1
      %p175 = por %p173, %p174
      %p177 = scmp.ne.s32.totalorder %s160, %s176
      %p178 = scmp.eq.s32.totalorder %s21, 0
      %p179 = por %p177, %p178
      %p180 = scmp.le.s32.totalorder 1, %s15
      %p181 = scmp.lt.s32.totalorder %s15, 3
      %p182 = pnand %p180, %p181
      %p183 = pneg %p182
      // Predicated region
      $region9: #{tpu_custom_call.1} parent=5 // pred_check
        _
      $region10: #{tpu_custom_call.1} parent=5 // pred_check_branch
        %185 = sbr.rel (%p182) target = $region12
      $region11: #{tpu_custom_call.1} parent=5 // pred_region
        %s186 = ssub.s32 %s15, 1
        // Predicated region
        $region13: #{tpu_custom_call.1} parent=11 // pred_check
          %p187 = pneg %p62
        $region14: #{tpu_custom_call.1} parent=11 // pred_check_branch
          %189 = sbr.rel (%p187) target = $region16
        $region15: #{tpu_custom_call.1} parent=11 // pred_region
          _
        $region16: #{tpu_custom_call.1} parent=11 // pred_fallthru
          _
        // Predicated region
        $region17: #{tpu_custom_call.1} parent=11 // pred_check
          %p190 = pneg %p83
        $region18: #{tpu_custom_call.1} parent=11 // pred_check_branch
          %192 = sbr.rel (%p190) target = $region20
        $region19: #{tpu_custom_call.1} parent=11 // pred_region
          _
        $region20: #{tpu_custom_call.1} parent=11 // pred_fallthru
          _
        // Predicated region
        $region21: #{tpu_custom_call.1} parent=11 // pred_check
          %p193 = pneg %p104
        $region22: #{tpu_custom_call.1} parent=11 // pred_check_branch
          %195 = sbr.rel (%p193) target = $region24
        $region23: #{tpu_custom_call.1} parent=11 // pred_region
          _
        $region24: #{tpu_custom_call.1} parent=11 // pred_fallthru
          _
        // Predicated region
        $region25: #{tpu_custom_call.1} parent=11 // pred_check
          %p196 = pneg %p125
        $region26: #{tpu_custom_call.1} parent=11 // pred_check_branch
          %198 = sbr.rel (%p196) target = $region28
        $region27: #{tpu_custom_call.1} parent=11 // pred_region
          _
        $region28: #{tpu_custom_call.1} parent=11 // pred_fallthru
          _
        // Predicated region
        $region29: #{tpu_custom_call.1} parent=11 // pred_check
          %p199 = pneg %p146
        $region30: #{tpu_custom_call.1} parent=11 // pred_check_branch
          %201 = sbr.rel (%p199) target = $region32
        $region31: #{tpu_custom_call.1} parent=11 // pred_region
          _
        $region32: #{tpu_custom_call.1} parent=11 // pred_fallthru
          _
      $region12: #{tpu_custom_call.1} parent=5 // pred_fallthru
        _
      %p202 = scmp.lt.s32.totalorder %s15, 2
      // Predicated region
      $region33: #{tpu_custom_call.1} parent=5 // pred_check
        %p203 = pneg %p202
      $region34: #{tpu_custom_call.1} parent=5 // pred_check_branch
        %205 = sbr.rel (%p203) target = $region36
      $region35: #{tpu_custom_call.1} parent=5 // pred_region
        // Predicated region
        $region37: #{tpu_custom_call.1} parent=35 // pred_check
          %p206 = pneg %p35
        $region38: #{tpu_custom_call.1} parent=35 // pred_check_branch
          %208 = sbr.rel (%p206) target = $region40
        $region39: #{tpu_custom_call.1} parent=35 // pred_region
          %p209 = scmp.lt.s32.totalorder %s15, 1
          %s210 = scalar_select %p209, %s15, 1
          %s211 = smul.addr %s210, 8
          %s212 = scalar_lea.vmem %s0, %s211
        $region40: #{tpu_custom_call.1} parent=35 // pred_fallthru
          _
      $region36: #{tpu_custom_call.1} parent=5 // pred_fallthru
        _
      %p213 = scmp.le.s32.totalorder 1, %s15
      %p214 = scmp.lt.s32.totalorder %s15, 3
      %p215 = pnand %p213, %p214
      %p216 = pneg %p215
      // Predicated region
      $region41: #{tpu_custom_call.1} parent=5 // pred_check
        _
      $region42: #{tpu_custom_call.1} parent=5 // pred_check_branch
        %218 = sbr.rel (%p215) target = $region44
      $region43: #{tpu_custom_call.1} parent=5 // pred_region
        %s219 = ssub.s32 %s15, 1
        %p220 = scmp.lt.s32.totalorder %s20, 1
        %s221 = scalar_select %p220, %s20, 1
        %s222 = smul.addr %s221, 8
        %s223 = scalar_lea.vmem %s0, %s222
        %p224 = pneg %p41
        %p225 = pneg %p38
        %p226 = pneg %p62
        %p227 = pneg %p59
        %p228 = pneg %p83
        %p229 = pneg %p80
        %p230 = pneg %p104
        %p231 = pneg %p101
        %p232 = pneg %p125
        %p233 = pneg %p122
        %p234 = pneg %p146
        %p235 = pneg %p143
        %p236 = pneg %p172
        %p237 = pneg %p169
        %s238 = sand.u32 %s159, 1
        %s239 = scalar_lea.sflag [#allocation3], %s238
        %s240 = sand.u32 %s159, 1
        %s241 = smul.addr %s240, 8
        %s242 = scalar_lea.vmem [#allocation2], %s241
        %p243 = scmp.lt.s32.totalorder %s20, 1
        %s244 = scalar_select %p243, %s20, 1
        %s245 = smul.addr %s244, 8
        %s246 = scalar_lea.vmem %s0, %s245
        %v247 = vld [vmem:[%s246] sm:$0xff]
        %v248 = vlaneseq
        %v249 = vshrl.u32 %v248, 7
        %v250 = vlaneseq
        %v251 = vand.u32 %v250, 127
        %vm252 = vcmp.gt.s32.totalorder %v251, %v249
        %v253 = vld [vmem:[%s1] sm:$0xff]
        %v254 = vld [vmem:[%s1 + $0x8] sm:$0xff]
        %v255 = vld [vmem:[%s1 + $0x10] sm:$0xff]
        %v256 = vld [vmem:[%s1 + $0x18] sm:$0xff]
        %vm257 = vcmask 261120
        %v259 = vsel %vm257, %v247, 0
        %261 = vmatprep.subr.mxu0 0.0
        %262 = vmatpush1.msra.mxu0 %v253
        %263 = vmatprep.subr.mxu0 0.0
        %264 = vmatpush1.msra.mxu0 %v254
        %265 = vmatprep.subr.mxu0 0.0
        %266 = vmatpush1.msra.mxu0 %v255
        %267 = vmatprep.subr.mxu0 0.0
        %268 = vmatpush1.msra.mxu0 %v256
        %269 = vmatprep.subr.mxu0 0.0
        %270 = vmatpush1.msra.mxu0 0.0
        %271 = vmatprep.subr.mxu0 0.0
        %272 = vmatpush1.msra.mxu0 0.0
        %273 = vmatprep.subr.mxu0 0.0
        %274 = vmatpush1.msra.mxu0 0.0
        %275 = vmatprep.subr.mxu0 0.0
        %276 = vmatpush1.msra.mxu0 0.0
        %277 = vmatprep.subr.mxu0 0.0
        %278 = vmatpush1.msra.mxu0 0.0
        %279 = vmatprep.subr.mxu0 0.0
        %280 = vmatpush1.msra.mxu0 0.0
        %281 = vmatprep.subr.mxu0 0.0
        %282 = vmatpush1.msra.mxu0 0.0
        %283 = vmatprep.subr.mxu0 0.0
        %284 = vmatpush1.msra.mxu0 0.0
        %285 = vmatprep.subr.mxu0 0.0
        %286 = vmatpush1.msra.mxu0 0.0
        %287 = vmatprep.subr.mxu0 0.0
        %288 = vmatpush1.msra.mxu0 0.0
        %289 = vmatprep.subr.mxu0 0.0
        %290 = vmatpush1.msra.mxu0 0.0
        %291 = vmatprep.subr.mxu0 0.0
        %292 = vmatpush1.msra.mxu0 0.0
        %293 = vmatprep.subr.mxu0 0.0
        %294 = vmatpush1.msra.mxu0 0.0
        %295 = vmatprep.subr.mxu0 0.0
        %296 = vmatpush1.msra.mxu0 0.0
        %297 = vmatprep.subr.mxu0 0.0
        %298 = vmatpush1.msra.mxu0 0.0
        %299 = vmatprep.subr.mxu0 0.0
        %300 = vmatpush1.msra.mxu0 0.0
        %301 = vmatprep.subr.mxu0 0.0
        %302 = vmatpush1.msra.mxu0 0.0
        %303 = vmatprep.subr.mxu0 0.0
        %304 = vmatpush1.msra.mxu0 0.0
        %305 = vmatprep.subr.mxu0 0.0
        %306 = vmatpush1.msra.mxu0 0.0
        %307 = vmatprep.subr.mxu0 0.0
        %308 = vmatpush1.msra.mxu0 0.0
        %309 = vmatprep.subr.mxu0 0.0
        %310 = vmatpush1.msra.mxu0 0.0
        %311 = vmatprep.subr.mxu0 0.0
        %312 = vmatpush1.msra.mxu0 0.0
        %313 = vmatprep.subr.mxu0 0.0
        %314 = vmatpush1.msra.mxu0 0.0
        %315 = vmatprep.subr.mxu0 0.0
        %316 = vmatpush1.msra.mxu0 0.0
        %317 = vmatprep.subr.mxu0 0.0
        %318 = vmatpush1.msra.mxu0 0.0
        %319 = vmatprep.subr.mxu0 0.0
        %320 = vmatpush1.msra.mxu0 0.0
        %321 = vmatprep.subr.mxu0 0.0
        %322 = vmatpush1.msra.mxu0 0.0
        %323 = vmatprep.subr.mxu0 0.0
        %324 = vmatpush1.msra.mxu0 0.0
        %325 = vmatprep.mubr.f32.mxu0 0.0
        %326 = vmatmul.mubr.f32.gmra.mrb[0].mxu0 %v259
        %v327 = vpop.f32.mrb[0].mxu0
        %v328 = vadd.f32 0.0, %v327
        %v329 = vpop.f32.mrb[0].mxu0
        %330 = vdwg.mxu0
        %v331 = vld [vmem:[%s2] sm:$0xff]
        %v332 = vld [vmem:[%s2 + $0x8] sm:$0xff]
        %v333 = vld [vmem:[%s2 + $0x10] sm:$0xff]
        %v334 = vld [vmem:[%s2 + $0x18] sm:$0xff]
        %335 = vmatprep.subr.mxu0 0.0
        %336 = vmatpush1.msra.mxu0 %v331
        %337 = vmatprep.subr.mxu0 0.0
        %338 = vmatpush1.msra.mxu0 %v332
        %339 = vmatprep.subr.mxu0 0.0
        %340 = vmatpush1.msra.mxu0 %v333
        %341 = vmatprep.subr.mxu0 0.0
        %342 = vmatpush1.msra.mxu0 %v334
        %343 = vmatprep.subr.mxu0 0.0
        %344 = vmatpush1.msra.mxu0 0.0
        %345 = vmatprep.subr.mxu0 0.0
        %346 = vmatpush1.msra.mxu0 0.0
        %347 = vmatprep.subr.mxu0 0.0
        %348 = vmatpush1.msra.mxu0 0.0
        %349 = vmatprep.subr.mxu0 0.0
        %350 = vmatpush1.msra.mxu0 0.0
        %351 = vmatprep.subr.mxu0 0.0
        %352 = vmatpush1.msra.mxu0 0.0
        %353 = vmatprep.subr.mxu0 0.0
        %354 = vmatpush1.msra.mxu0 0.0
        %355 = vmatprep.subr.mxu0 0.0
        %356 = vmatpush1.msra.mxu0 0.0
        %357 = vmatprep.subr.mxu0 0.0
        %358 = vmatpush1.msra.mxu0 0.0
        %359 = vmatprep.subr.mxu0 0.0
        %360 = vmatpush1.msra.mxu0 0.0
        %361 = vmatprep.subr.mxu0 0.0
        %362 = vmatpush1.msra.mxu0 0.0
        %363 = vmatprep.subr.mxu0 0.0
        %364 = vmatpush1.msra.mxu0 0.0
        %365 = vmatprep.subr.mxu0 0.0
        %366 = vmatpush1.msra.mxu0 0.0
        %367 = vmatprep.subr.mxu0 0.0
        %368 = vmatpush1.msra.mxu0 0.0
        %369 = vmatprep.subr.mxu0 0.0
        %370 = vmatpush1.msra.mxu0 0.0
        %371 = vmatprep.subr.mxu0 0.0
        %372 = vmatpush1.msra.mxu0 0.0
        %373 = vmatprep.subr.mxu0 0.0
        %374 = vmatpush1.msra.mxu0 0.0
        %375 = vmatprep.subr.mxu0 0.0
        %376 = vmatpush1.msra.mxu0 0.0
        %377 = vmatprep.subr.mxu0 0.0
        %378 = vmatpush1.msra.mxu0 0.0
        %379 = vmatprep.subr.mxu0 0.0
        %380 = vmatpush1.msra.mxu0 0.0
        %381 = vmatprep.subr.mxu0 0.0
        %382 = vmatpush1.msra.mxu0 0.0
        %383 = vmatprep.subr.mxu0 0.0
        %384 = vmatpush1.msra.mxu0 0.0
        %385 = vmatprep.subr.mxu0 0.0
        %386 = vmatpush1.msra.mxu0 0.0
        %387 = vmatprep.subr.mxu0 0.0
        %388 = vmatpush1.msra.mxu0 0.0
        %389 = vmatprep.subr.mxu0 0.0
        %390 = vmatpush1.msra.mxu0 0.0
        %391 = vmatprep.subr.mxu0 0.0
        %392 = vmatpush1.msra.mxu0 0.0
        %393 = vmatprep.subr.mxu0 0.0
        %394 = vmatpush1.msra.mxu0 0.0
        %395 = vmatprep.subr.mxu0 0.0
        %396 = vmatpush1.msra.mxu0 0.0
        %397 = vmatprep.subr.mxu0 0.0
        %398 = vmatpush1.msra.mxu0 0.0
        %399 = vmatprep.mubr.f32.mxu0 0.0
        %400 = vmatmul.mubr.f32.gmra.mrb[0].mxu0 %v259
        %v401 = vpop.f32.mrb[0].mxu0
        %v402 = vadd.f32 0.0, %v401
        %v403 = vpop.f32.mrb[0].mxu0
        %404 = vdwg.mxu0
        %v405 = vld [vmem:[%s3] sm:$0xff]
        %v406 = vld [vmem:[%s3 + $0x8] sm:$0xff]
        %v407 = vld [vmem:[%s3 + $0x10] sm:$0xff]
        %v408 = vld [vmem:[%s3 + $0x18] sm:$0xff]
        %409 = vmatprep.subr.mxu0 0.0
        %410 = vmatpush1.msra.mxu0 %v405
        %411 = vmatprep.subr.mxu0 0.0
        %412 = vmatpush1.msra.mxu0 %v406
        %413 = vmatprep.subr.mxu0 0.0
        %414 = vmatpush1.msra.mxu0 %v407
        %415 = vmatprep.subr.mxu0 0.0
        %416 = vmatpush1.msra.mxu0 %v408
        %417 = vmatprep.subr.mxu0 0.0
        %418 = vmatpush1.msra.mxu0 0.0
        %419 = vmatprep.subr.mxu0 0.0
        %420 = vmatpush1.msra.mxu0 0.0
        %421 = vmatprep.subr.mxu0 0.0
        %422 = vmatpush1.msra.mxu0 0.0
        %423 = vmatprep.subr.mxu0 0.0
        %424 = vmatpush1.msra.mxu0 0.0
        %425 = vmatprep.subr.mxu0 0.0
        %426 = vmatpush1.msra.mxu0 0.0
        %427 = vmatprep.subr.mxu0 0.0
        %428 = vmatpush1.msra.mxu0 0.0
        %429 = vmatprep.subr.mxu0 0.0
        %430 = vmatpush1.msra.mxu0 0.0
        %431 = vmatprep.subr.mxu0 0.0
        %432 = vmatpush1.msra.mxu0 0.0
        %433 = vmatprep.subr.mxu0 0.0
        %434 = vmatpush1.msra.mxu0 0.0
        %435 = vmatprep.subr.mxu0 0.0
        %436 = vmatpush1.msra.mxu0 0.0
        %437 = vmatprep.subr.mxu0 0.0
        %438 = vmatpush1.msra.mxu0 0.0
        %439 = vmatprep.subr.mxu0 0.0
        %440 = vmatpush1.msra.mxu0 0.0
        %441 = vmatprep.subr.mxu0 0.0
        %442 = vmatpush1.msra.mxu0 0.0
        %443 = vmatprep.subr.mxu0 0.0
        %444 = vmatpush1.msra.mxu0 0.0
        %445 = vmatprep.subr.mxu0 0.0
        %446 = vmatpush1.msra.mxu0 0.0
        %447 = vmatprep.subr.mxu0 0.0
        %448 = vmatpush1.msra.mxu0 0.0
        %449 = vmatprep.subr.mxu0 0.0
        %450 = vmatpush1.msra.mxu0 0.0
        %451 = vmatprep.subr.mxu0 0.0
        %452 = vmatpush1.msra.mxu0 0.0
        %453 = vmatprep.subr.mxu0 0.0
        %454 = vmatpush1.msra.mxu0 0.0
        %455 = vmatprep.subr.mxu0 0.0
        %456 = vmatpush1.msra.mxu0 0.0
        %457 = vmatprep.subr.mxu0 0.0
        %458 = vmatpush1.msra.mxu0 0.0
        %459 = vmatprep.subr.mxu0 0.0
        %460 = vmatpush1.msra.mxu0 0.0
        %461 = vmatprep.subr.mxu0 0.0
        %462 = vmatpush1.msra.mxu0 0.0
        %463 = vmatprep.subr.mxu0 0.0
        %464 = vmatpush1.msra.mxu0 0.0
        %465 = vmatprep.subr.mxu0 0.0
        %466 = vmatpush1.msra.mxu0 0.0
        %467 = vmatprep.subr.mxu0 0.0
        %468 = vmatpush1.msra.mxu0 0.0
        %469 = vmatprep.subr.mxu0 0.0
        %470 = vmatpush1.msra.mxu0 0.0
        %471 = vmatprep.subr.mxu0 0.0
        %472 = vmatpush1.msra.mxu0 0.0
        %473 = vmatprep.mubr.f32.mxu0 0.0
        %474 = vmatmul.mubr.f32.gmra.mrb[0].mxu0 %v259
        %v475 = vpop.f32.mrb[0].mxu0
        %v476 = vadd.f32 0.0, %v475
        %v477 = vpop.f32.mrb[0].mxu0
        %478 = vdwg.mxu0
        %vm479 = vcmask 64512
        %v481 = vsel %vm479, %v328, 0
        %v484 = vsel %vm479, %v402, 0
        %486 = vmatprep.subr.mxu0 0.0
        %487 = vmatpush1.xpose.msra.mxu0 %v484
        %488 = vmatprep.subr.mxu0 0.0
        %489 = vmatpush1.xpose.msra.mxu0 0.0
        %490 = vmatprep.subr.mxu0 0.0
        %491 = vmatpush1.xpose.msra.mxu0 0.0
        %492 = vmatprep.subr.mxu0 0.0
        %493 = vmatpush1.xpose.msra.mxu0 0.0
        %494 = vmatprep.subr.mxu0 0.0
        %495 = vmatpush1.xpose.msra.mxu0 0.0
        %496 = vmatprep.subr.mxu0 0.0
        %497 = vmatpush1.xpose.msra.mxu0 0.0
        %498 = vmatprep.subr.mxu0 0.0
        %499 = vmatpush1.xpose.msra.mxu0 0.0
        %500 = vmatprep.subr.mxu0 0.0
        %501 = vmatpush1.xpose.msra.mxu0 0.0
        %502 = vmatprep.subr.mxu0 0.0
        %503 = vmatpush1.xpose.msra.mxu0 0.0
        %504 = vmatprep.subr.mxu0 0.0
        %505 = vmatpush1.xpose.msra.mxu0 0.0
        %506 = vmatprep.subr.mxu0 0.0
        %507 = vmatpush1.xpose.msra.mxu0 0.0
        %508 = vmatprep.subr.mxu0 0.0
        %509 = vmatpush1.xpose.msra.mxu0 0.0
        %510 = vmatprep.subr.mxu0 0.0
        %511 = vmatpush1.xpose.msra.mxu0 0.0
        %512 = vmatprep.subr.mxu0 0.0
        %513 = vmatpush1.xpose.msra.mxu0 0.0
        %514 = vmatprep.subr.mxu0 0.0
        %515 = vmatpush1.xpose.msra.mxu0 0.0
        %516 = vmatprep.subr.mxu0 0.0
        %517 = vmatpush1.xpose.msra.mxu0 0.0
        %518 = vmatprep.subr.mxu0 0.0
        %519 = vmatpush1.xpose.msra.mxu0 0.0
        %520 = vmatprep.subr.mxu0 0.0
        %521 = vmatpush1.xpose.msra.mxu0 0.0
        %522 = vmatprep.subr.mxu0 0.0
        %523 = vmatpush1.xpose.msra.mxu0 0.0
        %524 = vmatprep.subr.mxu0 0.0
        %525 = vmatpush1.xpose.msra.mxu0 0.0
        %526 = vmatprep.subr.mxu0 0.0
        %527 = vmatpush1.xpose.msra.mxu0 0.0
        %528 = vmatprep.subr.mxu0 0.0
        %529 = vmatpush1.xpose.msra.mxu0 0.0
        %530 = vmatprep.subr.mxu0 0.0
        %531 = vmatpush1.xpose.msra.mxu0 0.0
        %532 = vmatprep.subr.mxu0 0.0
        %533 = vmatpush1.xpose.msra.mxu0 0.0
        %534 = vmatprep.subr.mxu0 0.0
        %535 = vmatpush1.xpose.msra.mxu0 0.0
        %536 = vmatprep.subr.mxu0 0.0
        %537 = vmatpush1.xpose.msra.mxu0 0.0
        %538 = vmatprep.subr.mxu0 0.0
        %539 = vmatpush1.xpose.msra.mxu0 0.0
        %540 = vmatprep.subr.mxu0 0.0
        %541 = vmatpush1.xpose.msra.mxu0 0.0
        %542 = vmatprep.subr.mxu0 0.0
        %543 = vmatpush1.xpose.msra.mxu0 0.0
        %544 = vmatprep.subr.mxu0 0.0
        %545 = vmatpush1.xpose.msra.mxu0 0.0
        %546 = vmatprep.subr.mxu0 0.0
        %547 = vmatpush1.xpose.msra.mxu0 0.0
        %548 = vmatprep.subr.mxu0 0.0
        %549 = vmatpush1.xpose.msra.mxu0 0.0
        %550 = vmatprep.mubr.f32.mxu0 0.0
        %551 = vmatmul.mubr.f32.gmra.mrb[0].mxu0 %v481
        %v552 = vpop.f32.mrb[0].mxu0
        %v553 = vadd.f32 0.0, %v552
        %v554 = vpop.f32.mrb[0].mxu0
        %555 = vdwg.mxu0
        %v556 = vmul.f32 %v553, 0.35355338
        %v557 = vsel %vm252, -inf, %v556
        %v558 = vsel %vm479, %v557, -inf
        %559 = vmax.xlane.f32.xlu0 %v558
        %v560 = vpop.xlane.xlu0 %559
        %v561 = vsub.f32 %v557, %v560
        %v562 = vmul.f32 %v561, 1.442695
        %v563 = vpow.pop %v562
        %v564 = vsel %vm479, %v563, 0.0
        %565 = vadd.xlane.f32.xlu0 %v564
        %v566 = vpop.xlane.xlu0 %565
        %v567 = vrcp.pop %v566
        %v568 = vmul.f32 %v563, %v567
        %v570 = vsel %vm479, %v568, 0
        %572 = vmatprep.subr.mxu0 0.0
        %573 = vmatpush1.msra.mxu0 %v476
        %574 = vmatprep.subr.mxu0 0.0
        %575 = vmatpush1.msra.mxu0 0.0
        %576 = vmatprep.subr.mxu0 0.0
        %577 = vmatpush1.msra.mxu0 0.0
        %578 = vmatprep.subr.mxu0 0.0
        %579 = vmatpush1.msra.mxu0 0.0
        %580 = vmatprep.subr.mxu0 0.0
        %581 = vmatpush1.msra.mxu0 0.0
        %582 = vmatprep.subr.mxu0 0.0
        %583 = vmatpush1.msra.mxu0 0.0
        %584 = vmatprep.subr.mxu0 0.0
        %585 = vmatpush1.msra.mxu0 0.0
        %586 = vmatprep.subr.mxu0 0.0
        %587 = vmatpush1.msra.mxu0 0.0
        %588 = vmatprep.subr.mxu0 0.0
        %589 = vmatpush1.msra.mxu0 0.0
        %590 = vmatprep.subr.mxu0 0.0
        %591 = vmatpush1.msra.mxu0 0.0
        %592 = vmatprep.subr.mxu0 0.0
        %593 = vmatpush1.msra.mxu0 0.0
        %594 = vmatprep.subr.mxu0 0.0
        %595 = vmatpush1.msra.mxu0 0.0
        %596 = vmatprep.subr.mxu0 0.0
        %597 = vmatpush1.msra.mxu0 0.0
        %598 = vmatprep.subr.mxu0 0.0
        %599 = vmatpush1.msra.mxu0 0.0
        %600 = vmatprep.subr.mxu0 0.0
        %601 = vmatpush1.msra.mxu0 0.0
        %602 = vmatprep.subr.mxu0 0.0
        %603 = vmatpush1.msra.mxu0 0.0
        %604 = vmatprep.subr.mxu0 0.0
        %605 = vmatpush1.msra.mxu0 0.0
        %606 = vmatprep.subr.mxu0 0.0
        %607 = vmatpush1.msra.mxu0 0.0
        %608 = vmatprep.subr.mxu0 0.0
        %609 = vmatpush1.msra.mxu0 0.0
        %610 = vmatprep.subr.mxu0 0.0
        %611 = vmatpush1.msra.mxu0 0.0
        %612 = vmatprep.subr.mxu0 0.0
        %613 = vmatpush1.msra.mxu0 0.0
        %614 = vmatprep.subr.mxu0 0.0
        %615 = vmatpush1.msra.mxu0 0.0
        %616 = vmatprep.subr.mxu0 0.0
        %617 = vmatpush1.msra.mxu0 0.0
        %618 = vmatprep.subr.mxu0 0.0
        %619 = vmatpush1.msra.mxu0 0.0
        %620 = vmatprep.subr.mxu0 0.0
        %621 = vmatpush1.msra.mxu0 0.0
        %622 = vmatprep.subr.mxu0 0.0
        %623 = vmatpush1.msra.mxu0 0.0
        %624 = vmatprep.subr.mxu0 0.0
        %625 = vmatpush1.msra.mxu0 0.0
        %626 = vmatprep.subr.mxu0 0.0
        %627 = vmatpush1.msra.mxu0 0.0
        %628 = vmatprep.subr.mxu0 0.0
        %629 = vmatpush1.msra.mxu0 0.0
        %630 = vmatprep.subr.mxu0 0.0
        %631 = vmatpush1.msra.mxu0 0.0
        %632 = vmatprep.subr.mxu0 0.0
        %633 = vmatpush1.msra.mxu0 0.0
        %634 = vmatprep.subr.mxu0 0.0
        %635 = vmatpush1.msra.mxu0 0.0
        %636 = vmatprep.mubr.f32.mxu0 0.0
        %637 = vmatmul.mubr.f32.gmra.mrb[0].mxu0 %v570
        %v638 = vpop.f32.mrb[0].mxu0
        %v639 = vadd.f32 0.0, %v638
        %v640 = vpop.f32.mrb[0].mxu0
        %641 = vdwg.mxu0
        %v642 = vld [vmem:[%s4] sm:$0xff]
        %s643 = scalar_lea.vmem %s1, 32
        %v644 = vld [vmem:[%s643] sm:$0xff]
        %v645 = vld [vmem:[%s643 + $0x8] sm:$0xff]
        %v646 = vld [vmem:[%s643 + $0x10] sm:$0xff]
        %v647 = vld [vmem:[%s643 + $0x18] sm:$0xff]
        %648 = vmatprep.subr.mxu0 0.0
        %649 = vmatpush1.msra.mxu0 %v644
        %650 = vmatprep.subr.mxu0 0.0
        %651 = vmatpush1.msra.mxu0 %v645
        %652 = vmatprep.subr.mxu0 0.0
        %653 = vmatpush1.msra.mxu0 %v646
        %654 = vmatprep.subr.mxu0 0.0
        %655 = vmatpush1.msra.mxu0 %v647
        %656 = vmatprep.subr.mxu0 0.0
        %657 = vmatpush1.msra.mxu0 0.0
        %658 = vmatprep.subr.mxu0 0.0
        %659 = vmatpush1.msra.mxu0 0.0
        %660 = vmatprep.subr.mxu0 0.0
        %661 = vmatpush1.msra.mxu0 0.0
        %662 = vmatprep.subr.mxu0 0.0
        %663 = vmatpush1.msra.mxu0 0.0
        %664 = vmatprep.subr.mxu0 0.0
        %665 = vmatpush1.msra.mxu0 0.0
        %666 = vmatprep.subr.mxu0 0.0
        %667 = vmatpush1.msra.mxu0 0.0
        %668 = vmatprep.subr.mxu0 0.0
        %669 = vmatpush1.msra.mxu0 0.0
        %670 = vmatprep.subr.mxu0 0.0
        %671 = vmatpush1.msra.mxu0 0.0
        %672 = vmatprep.subr.mxu0 0.0
        %673 = vmatpush1.msra.mxu0 0.0
        %674 = vmatprep.subr.mxu0 0.0
        %675 = vmatpush1.msra.mxu0 0.0
        %676 = vmatprep.subr.mxu0 0.0
        %677 = vmatpush1.msra.mxu0 0.0
        %678 = vmatprep.subr.mxu0 0.0
        %679 = vmatpush1.msra.mxu0 0.0
        %680 = vmatprep.subr.mxu0 0.0
        %681 = vmatpush1.msra.mxu0 0.0
        %682 = vmatprep.subr.mxu0 0.0
        %683 = vmatpush1.msra.mxu0 0.0
        %684 = vmatprep.subr.mxu0 0.0
        %685 = vmatpush1.msra.mxu0 0.0
        %686 = vmatprep.subr.mxu0 0.0
        %687 = vmatpush1.msra.mxu0 0.0
        %688 = vmatprep.subr.mxu0 0.0
        %689 = vmatpush1.msra.mxu0 0.0
        %690 = vmatprep.subr.mxu0 0.0
        %691 = vmatpush1.msra.mxu0 0.0
        %692 = vmatprep.subr.mxu0 0.0
        %693 = vmatpush1.msra.mxu0 0.0
        %694 = vmatprep.subr.mxu0 0.0
        %695 = vmatpush1.msra.mxu0 0.0
        %696 = vmatprep.subr.mxu0 0.0
        %697 = vmatpush1.msra.mxu0 0.0
        %698 = vmatprep.subr.mxu0 0.0
        %699 = vmatpush1.msra.mxu0 0.0
        %700 = vmatprep.subr.mxu0 0.0
        %701 = vmatpush1.msra.mxu0 0.0
        %702 = vmatprep.subr.mxu0 0.0
        %703 = vmatpush1.msra.mxu0 0.0
        %704 = vmatprep.subr.mxu0 0.0
        %705 = vmatpush1.msra.mxu0 0.0
        %706 = vmatprep.subr.mxu0 0.0
        %707 = vmatpush1.msra.mxu0 0.0
        %708 = vmatprep.subr.mxu0 0.0
        %709 = vmatpush1.msra.mxu0 0.0
        %710 = vmatprep.subr.mxu0 0.0
        %711 = vmatpush1.msra.mxu0 0.0
        %712 = vmatprep.mubr.f32.mxu0 0.0
        %713 = vmatmul.mubr.f32.gmra.mrb[0].mxu0 %v259
        %v714 = vpop.f32.mrb[0].mxu0
        %v715 = vadd.f32 0.0, %v714
        %v716 = vpop.f32.mrb[0].mxu0
        %717 = vdwg.mxu0
        %s718 = scalar_lea.vmem %s2, 32
        %v719 = vld [vmem:[%s718] sm:$0xff]
        %v720 = vld [vmem:[%s718 + $0x8] sm:$0xff]
        %v721 = vld [vmem:[%s718 + $0x10] sm:$0xff]
        %v722 = vld [vmem:[%s718 + $0x18] sm:$0xff]
        %723 = vmatprep.subr.mxu0 0.0
        %724 = vmatpush1.msra.mxu0 %v719
        %725 = vmatprep.subr.mxu0 0.0
        %726 = vmatpush1.msra.mxu0 %v720
        %727 = vmatprep.subr.mxu0 0.0
        %728 = vmatpush1.msra.mxu0 %v721
        %729 = vmatprep.subr.mxu0 0.0
        %730 = vmatpush1.msra.mxu0 %v722
        %731 = vmatprep.subr.mxu0 0.0
        %732 = vmatpush1.msra.mxu0 0.0
        %733 = vmatprep.subr.mxu0 0.0
        %734 = vmatpush1.msra.mxu0 0.0
        %735 = vmatprep.subr.mxu0 0.0
        %736 = vmatpush1.msra.mxu0 0.0
        %737 = vmatprep.subr.mxu0 0.0
        %738 = vmatpush1.msra.mxu0 0.0
        %739 = vmatprep.subr.mxu0 0.0
        %740 = vmatpush1.msra.mxu0 0.0
        %741 = vmatprep.subr.mxu0 0.0
        %742 = vmatpush1.msra.mxu0 0.0
        %743 = vmatprep.subr.mxu0 0.0
        %744 = vmatpush1.msra.mxu0 0.0
        %745 = vmatprep.subr.mxu0 0.0
        %746 = vmatpush1.msra.mxu0 0.0
        %747 = vmatprep.subr.mxu0 0.0
        %748 = vmatpush1.msra.mxu0 0.0
        %749 = vmatprep.subr.mxu0 0.0
        %750 = vmatpush1.msra.mxu0 0.0
        %751 = vmatprep.subr.mxu0 0.0
        %752 = vmatpush1.msra.mxu0 0.0
        %753 = vmatprep.subr.mxu0 0.0
        %754 = vmatpush1.msra.mxu0 0.0
        %755 = vmatprep.subr.mxu0 0.0
        %756 = vmatpush1.msra.mxu0 0.0
        %757 = vmatprep.subr.mxu0 0.0
        %758 = vmatpush1.msra.mxu0 0.0
        %759 = vmatprep.subr.mxu0 0.0
        %760 = vmatpush1.msra.mxu0 0.0
        %761 = vmatprep.subr.mxu0 0.0
        %762 = vmatpush1.msra.mxu0 0.0
        %763 = vmatprep.subr.mxu0 0.0
        %764 = vmatpush1.msra.mxu0 0.0
        %765 = vmatprep.subr.mxu0 0.0
        %766 = vmatpush1.msra.mxu0 0.0
        %767 = vmatprep.subr.mxu0 0.0
        %768 = vmatpush1.msra.mxu0 0.0
        %769 = vmatprep.subr.mxu0 0.0
        %770 = vmatpush1.msra.mxu0 0.0
        %771 = vmatprep.subr.mxu0 0.0
        %772 = vmatpush1.msra.mxu0 0.0
        %773 = vmatprep.subr.mxu0 0.0
        %774 = vmatpush1.msra.mxu0 0.0
        %775 = vmatprep.subr.mxu0 0.0
        %776 = vmatpush1.msra.mxu0 0.0
        %777 = vmatprep.subr.mxu0 0.0
        %778 = vmatpush1.msra.mxu0 0.0
        %779 = vmatprep.subr.mxu0 0.0
        %780 = vmatpush1.msra.mxu0 0.0
        %781 = vmatprep.subr.mxu0 0.0
        %782 = vmatpush1.msra.mxu0 0.0
        %783 = vmatprep.subr.mxu0 0.0
        %784 = vmatpush1.msra.mxu0 0.0
        %785 = vmatprep.subr.mxu0 0.0
        %786 = vmatpush1.msra.mxu0 0.0
        %787 = vmatprep.mubr.f32.mxu0 0.0
        %788 = vmatmul.mubr.f32.gmra.mrb[0].mxu0 %v259
        %v789 = vpop.f32.mrb[0].mxu0
        %v790 = vadd.f32 0.0, %v789
        %v791 = vpop.f32.mrb[0].mxu0
        %792 = vdwg.mxu0
        %s793 = scalar_lea.vmem %s3, 32
        %v794 = vld [vmem:[%s793] sm:$0xff]
        %v795 = vld [vmem:[%s793 + $0x8] sm:$0xff]
        %v796 = vld [vmem:[%s793 + $0x10] sm:$0xff]
        %v797 = vld [vmem:[%s793 + $0x18] sm:$0xff]
        %798 = vmatprep.subr.mxu0 0.0
        %799 = vmatpush1.msra.mxu0 %v794
        %800 = vmatprep.subr.mxu0 0.0
        %801 = vmatpush1.msra.mxu0 %v795
        %802 = vmatprep.subr.mxu0 0.0
        %803 = vmatpush1.msra.mxu0 %v796
        %804 = vmatprep.subr.mxu0 0.0
        %805 = vmatpush1.msra.mxu0 %v797
        %806 = vmatprep.subr.mxu0 0.0
        %807 = vmatpush1.msra.mxu0 0.0
        %808 = vmatprep.subr.mxu0 0.0
        %809 = vmatpush1.msra.mxu0 0.0
        %810 = vmatprep.subr.mxu0 0.0
        %811 = vmatpush1.msra.mxu0 0.0
        %812 = vmatprep.subr.mxu0 0.0
        %813 = vmatpush1.msra.mxu0 0.0
        %814 = vmatprep.subr.mxu0 0.0
        %815 = vmatpush1.msra.mxu0 0.0
        %816 = vmatprep.subr.mxu0 0.0
        %817 = vmatpush1.msra.mxu0 0.0
        %818 = vmatprep.subr.mxu0 0.0
        %819 = vmatpush1.msra.mxu0 0.0
        %820 = vmatprep.subr.mxu0 0.0
        %821 = vmatpush1.msra.mxu0 0.0
        %822 = vmatprep.subr.mxu0 0.0
        %823 = vmatpush1.msra.mxu0 0.0
        %824 = vmatprep.subr.mxu0 0.0
        %825 = vmatpush1.msra.mxu0 0.0
        %826 = vmatprep.subr.mxu0 0.0
        %827 = vmatpush1.msra.mxu0 0.0
        %828 = vmatprep.subr.mxu0 0.0
        %829 = vmatpush1.msra.mxu0 0.0
        %830 = vmatprep.subr.mxu0 0.0
        %831 = vmatpush1.msra.mxu0 0.0
        %832 = vmatprep.subr.mxu0 0.0
        %833 = vmatpush1.msra.mxu0 0.0
        %834 = vmatprep.subr.mxu0 0.0
        %835 = vmatpush1.msra.mxu0 0.0
        %836 = vmatprep.subr.mxu0 0.0
        %837 = vmatpush1.msra.mxu0 0.0
        %838 = vmatprep.subr.mxu0 0.0
        %839 = vmatpush1.msra.mxu0 0.0
        %840 = vmatprep.subr.mxu0 0.0
        %841 = vmatpush1.msra.mxu0 0.0
        %842 = vmatprep.subr.mxu0 0.0
        %843 = vmatpush1.msra.mxu0 0.0
        %844 = vmatprep.subr.mxu0 0.0
        %845 = vmatpush1.msra.mxu0 0.0
        %846 = vmatprep.subr.mxu0 0.0
        %847 = vmatpush1.msra.mxu0 0.0
        %848 = vmatprep.subr.mxu0 0.0
        %849 = vmatpush1.msra.mxu0 0.0
        %850 = vmatprep.subr.mxu0 0.0
        %851 = vmatpush1.msra.mxu0 0.0
        %852 = vmatprep.subr.mxu0 0.0
        %853 = vmatpush1.msra.mxu0 0.0
        %854 = vmatprep.subr.mxu0 0.0
        %855 = vmatpush1.msra.mxu0 0.0
        %856 = vmatprep.subr.mxu0 0.0
        %857 = vmatpush1.msra.mxu0 0.0
        %858 = vmatprep.subr.mxu0 0.0
        %859 = vmatpush1.msra.mxu0 0.0
        %860 = vmatprep.subr.mxu0 0.0
        %861 = vmatpush1.msra.mxu0 0.0
        %862 = vmatprep.mubr.f32.mxu0 0.0
        %863 = vmatmul.mubr.f32.gmra.mrb[0].mxu0 %v259
        %v864 = vpop.f32.mrb[0].mxu0
        %v865 = vadd.f32 0.0, %v864
        %v866 = vpop.f32.mrb[0].mxu0
        %867 = vdwg.mxu0
        %v869 = vsel %vm479, %v715, 0
        %v872 = vsel %vm479, %v790, 0
        %874 = vmatprep.subr.mxu0 0.0
        %875 = vmatpush1.xpose.msra.mxu0 %v872
        %876 = vmatprep.subr.mxu0 0.0
        %877 = vmatpush1.xpose.msra.mxu0 0.0
        %878 = vmatprep.subr.mxu0 0.0
        %879 = vmatpush1.xpose.msra.mxu0 0.0
        %880 = vmatprep.subr.mxu0 0.0
        %881 = vmatpush1.xpose.msra.mxu0 0.0
        %882 = vmatprep.subr.mxu0 0.0
        %883 = vmatpush1.xpose.msra.mxu0 0.0
        %884 = vmatprep.subr.mxu0 0.0
        %885 = vmatpush1.xpose.msra.mxu0 0.0
        %886 = vmatprep.subr.mxu0 0.0
        %887 = vmatpush1.xpose.msra.mxu0 0.0
        %888 = vmatprep.subr.mxu0 0.0
        %889 = vmatpush1.xpose.msra.mxu0 0.0
        %890 = vmatprep.subr.mxu0 0.0
        %891 = vmatpush1.xpose.msra.mxu0 0.0
        %892 = vmatprep.subr.mxu0 0.0
        %893 = vmatpush1.xpose.msra.mxu0 0.0
        %894 = vmatprep.subr.mxu0 0.0
        %895 = vmatpush1.xpose.msra.mxu0 0.0
        %896 = vmatprep.subr.mxu0 0.0
        %897 = vmatpush1.xpose.msra.mxu0 0.0
        %898 = vmatprep.subr.mxu0 0.0
        %899 = vmatpush1.xpose.msra.mxu0 0.0
        %900 = vmatprep.subr.mxu0 0.0
        %901 = vmatpush1.xpose.msra.mxu0 0.0
        %902 = vmatprep.subr.mxu0 0.0
        %903 = vmatpush1.xpose.msra.mxu0 0.0
        %904 = vmatprep.subr.mxu0 0.0
        %905 = vmatpush1.xpose.msra.mxu0 0.0
        %906 = vmatprep.subr.mxu0 0.0
        %907 = vmatpush1.xpose.msra.mxu0 0.0
        %908 = vmatprep.subr.mxu0 0.0
        %909 = vmatpush1.xpose.msra.mxu0 0.0
        %910 = vmatprep.subr.mxu0 0.0
        %911 = vmatpush1.xpose.msra.mxu0 0.0
        %912 = vmatprep.subr.mxu0 0.0
        %913 = vmatpush1.xpose.msra.mxu0 0.0
        %914 = vmatprep.subr.mxu0 0.0
        %915 = vmatpush1.xpose.msra.mxu0 0.0
        %916 = vmatprep.subr.mxu0 0.0
        %917 = vmatpush1.xpose.msra.mxu0 0.0
        %918 = vmatprep.subr.mxu0 0.0
        %919 = vmatpush1.xpose.msra.mxu0 0.0
        %920 = vmatprep.subr.mxu0 0.0
        %921 = vmatpush1.xpose.msra.mxu0 0.0
        %922 = vmatprep.subr.mxu0 0.0
        %923 = vmatpush1.xpose.msra.mxu0 0.0
        %924 = vmatprep.subr.mxu0 0.0
        %925 = vmatpush1.xpose.msra.mxu0 0.0
        %926 = vmatprep.subr.mxu0 0.0
        %927 = vmatpush1.xpose.msra.mxu0 0.0
        %928 = vmatprep.subr.mxu0 0.0
        %929 = vmatpush1.xpose.msra.mxu0 0.0
        %930 = vmatprep.subr.mxu0 0.0
        %931 = vmatpush1.xpose.msra.mxu0 0.0
        %932 = vmatprep.subr.mxu0 0.0
        %933 = vmatpush1.xpose.msra.mxu0 0.0
        %934 = vmatprep.subr.mxu0 0.0
        %935 = vmatpush1.xpose.msra.mxu0 0.0
        %936 = vmatprep.subr.mxu0 0.0
        %937 = vmatpush1.xpose.msra.mxu0 0.0
        %938 = vmatprep.mubr.f32.mxu0 0.0
        %939 = vmatmul.mubr.f32.gmra.mrb[0].mxu0 %v869
        %v940 = vpop.f32.mrb[0].mxu0
        %v941 = vadd.f32 0.0, %v940
        %v942 = vpop.f32.mrb[0].mxu0
        %943 = vdwg.mxu0
        %v944 = vmul.f32 %v941, 0.35355338
        %v945 = vsel %vm252, -inf, %v944
        %v946 = vsel %vm479, %v945, -inf
        %947 = vmax.xlane.f32.xlu0 %v946
        %v948 = vpop.xlane.xlu0 %947
        %v949 = vsub.f32 %v945, %v948
        %v950 = vmul.f32 %v949, 1.442695
        %v951 = vpow.pop %v950
        %v952 = vsel %vm479, %v951, 0.0
        %953 = vadd.xlane.f32.xlu0 %v952
        %v954 = vpop.xlane.xlu0 %953
        %v955 = vrcp.pop %v954
        %v956 = vmul.f32 %v951, %v955
        %v958 = vsel %vm479, %v956, 0
        %960 = vmatprep.subr.mxu0 0.0
        %961 = vmatpush1.msra.mxu0 %v865
        %962 = vmatprep.subr.mxu0 0.0
        %963 = vmatpush1.msra.mxu0 0.0
        %964 = vmatprep.subr.mxu0 0.0
        %965 = vmatpush1.msra.mxu0 0.0
        %966 = vmatprep.subr.mxu0 0.0
        %967 = vmatpush1.msra.mxu0 0.0
        %968 = vmatprep.subr.mxu0 0.0
        %969 = vmatpush1.msra.mxu0 0.0
        %970 = vmatprep.subr.mxu0 0.0
        %971 = vmatpush1.msra.mxu0 0.0
        %972 = vmatprep.subr.mxu0 0.0
        %973 = vmatpush1.msra.mxu0 0.0
        %974 = vmatprep.subr.mxu0 0.0
        %975 = vmatpush1.msra.mxu0 0.0
        %976 = vmatprep.subr.mxu0 0.0
        %977 = vmatpush1.msra.mxu0 0.0
        %978 = vmatprep.subr.mxu0 0.0
        %979 = vmatpush1.msra.mxu0 0.0
        %980 = vmatprep.subr.mxu0 0.0
        %981 = vmatpush1.msra.mxu0 0.0
        %982 = vmatprep.subr.mxu0 0.0
        %983 = vmatpush1.msra.mxu0 0.0
        %984 = vmatprep.subr.mxu0 0.0
        %985 = vmatpush1.msra.mxu0 0.0
        %986 = vmatprep.subr.mxu0 0.0
        %987 = vmatpush1.msra.mxu0 0.0
        %988 = vmatprep.subr.mxu0 0.0
        %989 = vmatpush1.msra.mxu0 0.0
        %990 = vmatprep.subr.mxu0 0.0
        %991 = vmatpush1.msra.mxu0 0.0
        %992 = vmatprep.subr.mxu0 0.0
        %993 = vmatpush1.msra.mxu0 0.0
        %994 = vmatprep.subr.mxu0 0.0
        %995 = vmatpush1.msra.mxu0 0.0
        %996 = vmatprep.subr.mxu0 0.0
        %997 = vmatpush1.msra.mxu0 0.0
        %998 = vmatprep.subr.mxu0 0.0
        %999 = vmatpush1.msra.mxu0 0.0
        %1000 = vmatprep.subr.mxu0 0.0
        %1001 = vmatpush1.msra.mxu0 0.0
        %1002 = vmatprep.subr.mxu0 0.0
        %1003 = vmatpush1.msra.mxu0 0.0
        %1004 = vmatprep.subr.mxu0 0.0
        %1005 = vmatpush1.msra.mxu0 0.0
        %1006 = vmatprep.subr.mxu0 0.0
        %1007 = vmatpush1.msra.mxu0 0.0
        %1008 = vmatprep.subr.mxu0 0.0
        %1009 = vmatpush1.msra.mxu0 0.0
        %1010 = vmatprep.subr.mxu0 0.0
        %1011 = vmatpush1.msra.mxu0 0.0
        %1012 = vmatprep.subr.mxu0 0.0
        %1013 = vmatpush1.msra.mxu0 0.0
        %1014 = vmatprep.subr.mxu0 0.0
        %1015 = vmatpush1.msra.mxu0 0.0
        %1016 = vmatprep.subr.mxu0 0.0
        %1017 = vmatpush1.msra.mxu0 0.0
        %1018 = vmatprep.subr.mxu0 0.0
        %1019 = vmatpush1.msra.mxu0 0.0
        %1020 = vmatprep.subr.mxu0 0.0
        %1021 = vmatpush1.msra.mxu0 0.0
        %1022 = vmatprep.subr.mxu0 0.0
        %1023 = vmatpush1.msra.mxu0 0.0
        %1024 = vmatprep.mubr.f32.mxu0 0.0
        %1025 = vmatmul.mubr.f32.gmra.mrb[0].mxu0 %v958
        %v1026 = vpop.f32.mrb[0].mxu0
        %v1027 = vadd.f32 0.0, %v1026
        %v1028 = vpop.f32.mrb[0].mxu0
        %1029 = vdwg.mxu0
        %s1030 = scalar_lea.vmem %s4, 8
        %v1031 = vld [vmem:[%s1030] sm:$0xff]
        %v1033 = vsel %vm479, %v1027, 0
        %1035 = vmatprep.subr.mxu0 0.0
        %1036 = vmatpush1.msra.mxu0 %v1031
        %1037 = vmatprep.subr.mxu0 0.0
        %1038 = vmatpush1.msra.mxu0 0.0
        %1039 = vmatprep.subr.mxu0 0.0
        %1040 = vmatpush1.msra.mxu0 0.0
        %1041 = vmatprep.subr.mxu0 0.0
        %1042 = vmatpush1.msra.mxu0 0.0
        %1043 = vmatprep.subr.mxu0 0.0
        %1044 = vmatpush1.msra.mxu0 0.0
        %1045 = vmatprep.subr.mxu0 0.0
        %1046 = vmatpush1.msra.mxu0 0.0
        %1047 = vmatprep.subr.mxu0 0.0
        %1048 = vmatpush1.msra.mxu0 0.0
        %1049 = vmatprep.subr.mxu0 0.0
        %1050 = vmatpush1.msra.mxu0 0.0
        %1051 = vmatprep.subr.mxu0 0.0
        %1052 = vmatpush1.msra.mxu0 0.0
        %1053 = vmatprep.subr.mxu0 0.0
        %1054 = vmatpush1.msra.mxu0 0.0
        %1055 = vmatprep.subr.mxu0 0.0
        %1056 = vmatpush1.msra.mxu0 0.0
        %1057 = vmatprep.subr.mxu0 0.0
        %1058 = vmatpush1.msra.mxu0 0.0
        %1059 = vmatprep.subr.mxu0 0.0
        %1060 = vmatpush1.msra.mxu0 0.0
        %1061 = vmatprep.subr.mxu0 0.0
        %1062 = vmatpush1.msra.mxu0 0.0
        %1063 = vmatprep.subr.mxu0 0.0
        %1064 = vmatpush1.msra.mxu0 0.0
        %1065 = vmatprep.subr.mxu0 0.0
        %1066 = vmatpush1.msra.mxu0 0.0
        %1067 = vmatprep.subr.mxu0 0.0
        %1068 = vmatpush1.msra.mxu0 0.0
        %1069 = vmatprep.subr.mxu0 0.0
        %1070 = vmatpush1.msra.mxu0 0.0
        %1071 = vmatprep.subr.mxu0 0.0
        %1072 = vmatpush1.msra.mxu0 0.0
        %1073 = vmatprep.subr.mxu0 0.0
        %1074 = vmatpush1.msra.mxu0 0.0
        %1075 = vmatprep.subr.mxu0 0.0
        %1076 = vmatpush1.msra.mxu0 0.0
        %1077 = vmatprep.subr.mxu0 0.0
        %1078 = vmatpush1.msra.mxu0 0.0
        %1079 = vmatprep.subr.mxu0 0.0
        %1080 = vmatpush1.msra.mxu0 0.0
        %1081 = vmatprep.subr.mxu0 0.0
        %1082 = vmatpush1.msra.mxu0 0.0
        %1083 = vmatprep.subr.mxu0 0.0
        %1084 = vmatpush1.msra.mxu0 0.0
        %1085 = vmatprep.subr.mxu0 0.0
        %1086 = vmatpush1.msra.mxu0 0.0
        %1087 = vmatprep.subr.mxu0 0.0
        %1088 = vmatpush1.msra.mxu0 0.0
        %1089 = vmatprep.subr.mxu0 0.0
        %1090 = vmatpush1.msra.mxu0 0.0
        %1091 = vmatprep.subr.mxu0 0.0
        %1092 = vmatpush1.msra.mxu0 0.0
        %1093 = vmatprep.subr.mxu0 0.0
        %1094 = vmatpush1.msra.mxu0 0.0
        %1095 = vmatprep.subr.mxu0 0.0
        %1096 = vmatpush1.msra.mxu0 0.0
        %1097 = vmatprep.subr.mxu0 0.0
        %1098 = vmatpush1.msra.mxu0 0.0
        %1099 = vmatprep.mubr.f32.mxu0 0.0
        %1100 = vmatmul.mubr.f32.gmra.mrb[0].mxu0 %v1033
        %v1101 = vpop.f32.mrb[0].mxu0
        %v1102 = vadd.f32 0.0, %v1101
        %v1103 = vpop.f32.mrb[0].mxu0
        %1104 = vdwg.mxu0
        %v1106 = vsel %vm479, %v639, 0
        %1108 = vmatprep.subr.mxu0 0.0
        %1109 = vmatpush1.msra.mxu0 %v642
        %1110 = vmatprep.subr.mxu0 0.0
        %1111 = vmatpush1.msra.mxu0 0.0
        %1112 = vmatprep.subr.mxu0 0.0
        %1113 = vmatpush1.msra.mxu0 0.0
        %1114 = vmatprep.subr.mxu0 0.0
        %1115 = vmatpush1.msra.mxu0 0.0
        %1116 = vmatprep.subr.mxu0 0.0
        %1117 = vmatpush1.msra.mxu0 0.0
        %1118 = vmatprep.subr.mxu0 0.0
        %1119 = vmatpush1.msra.mxu0 0.0
        %1120 = vmatprep.subr.mxu0 0.0
        %1121 = vmatpush1.msra.mxu0 0.0
        %1122 = vmatprep.subr.mxu0 0.0
        %1123 = vmatpush1.msra.mxu0 0.0
        %1124 = vmatprep.subr.mxu0 0.0
        %1125 = vmatpush1.msra.mxu0 0.0
        %1126 = vmatprep.subr.mxu0 0.0
        %1127 = vmatpush1.msra.mxu0 0.0
        %1128 = vmatprep.subr.mxu0 0.0
        %1129 = vmatpush1.msra.mxu0 0.0
        %1130 = vmatprep.subr.mxu0 0.0
        %1131 = vmatpush1.msra.mxu0 0.0
        %1132 = vmatprep.subr.mxu0 0.0
        %1133 = vmatpush1.msra.mxu0 0.0
        %1134 = vmatprep.subr.mxu0 0.0
        %1135 = vmatpush1.msra.mxu0 0.0
        %1136 = vmatprep.subr.mxu0 0.0
        %1137 = vmatpush1.msra.mxu0 0.0
        %1138 = vmatprep.subr.mxu0 0.0
        %1139 = vmatpush1.msra.mxu0 0.0
        %1140 = vmatprep.subr.mxu0 0.0
        %1141 = vmatpush1.msra.mxu0 0.0
        %1142 = vmatprep.subr.mxu0 0.0
        %1143 = vmatpush1.msra.mxu0 0.0
        %1144 = vmatprep.subr.mxu0 0.0
        %1145 = vmatpush1.msra.mxu0 0.0
        %1146 = vmatprep.subr.mxu0 0.0
        %1147 = vmatpush1.msra.mxu0 0.0
        %1148 = vmatprep.subr.mxu0 0.0
        %1149 = vmatpush1.msra.mxu0 0.0
        %1150 = vmatprep.subr.mxu0 0.0
        %1151 = vmatpush1.msra.mxu0 0.0
        %1152 = vmatprep.subr.mxu0 0.0
        %1153 = vmatpush1.msra.mxu0 0.0
        %1154 = vmatprep.subr.mxu0 0.0
        %1155 = vmatpush1.msra.mxu0 0.0
        %1156 = vmatprep.subr.mxu0 0.0
        %1157 = vmatpush1.msra.mxu0 0.0
        %1158 = vmatprep.subr.mxu0 0.0
        %1159 = vmatpush1.msra.mxu0 0.0
        %1160 = vmatprep.subr.mxu0 0.0
        %1161 = vmatpush1.msra.mxu0 0.0
        %1162 = vmatprep.subr.mxu0 0.0
        %1163 = vmatpush1.msra.mxu0 0.0
        %1164 = vmatprep.subr.mxu0 0.0
        %1165 = vmatpush1.msra.mxu0 0.0
        %1166 = vmatprep.subr.mxu0 0.0
        %1167 = vmatpush1.msra.mxu0 0.0
        %1168 = vmatprep.subr.mxu0 0.0
        %1169 = vmatpush1.msra.mxu0 0.0
        %1170 = vmatprep.subr.mxu0 0.0
        %1171 = vmatpush1.msra.mxu0 0.0
        %1172 = vmatprep.mubr.f32.mxu0 0.0
        %1173 = vmatmul.mubr.f32.gmra.mrb[0].mxu0 %v1106
        %v1174 = vpop.f32.mrb[0].mxu0
        %v1175 = vadd.f32 %v1102, %v1174
        %v1176 = vpop.f32.mrb[0].mxu0
        %1177 = vdwg.mxu0
        %s1178 = scalar_lea.vmem %s1, 64
        %v1179 = vld [vmem:[%s1178] sm:$0xff]
        %v1180 = vld [vmem:[%s1178 + $0x8] sm:$0xff]
        %v1181 = vld [vmem:[%s1178 + $0x10] sm:$0xff]
        %v1182 = vld [vmem:[%s1178 + $0x18] sm:$0xff]
        %1183 = vmatprep.subr.mxu0 0.0
        %1184 = vmatpush1.msra.mxu0 %v1179
        %1185 = vmatprep.subr.mxu0 0.0
        %1186 = vmatpush1.msra.mxu0 %v1180
        %1187 = vmatprep.subr.mxu0 0.0
        %1188 = vmatpush1.msra.mxu0 %v1181
        %1189 = vmatprep.subr.mxu0 0.0
        %1190 = vmatpush1.msra.mxu0 %v1182
        %1191 = vmatprep.subr.mxu0 0.0
        %1192 = vmatpush1.msra.mxu0 0.0
        %1193 = vmatprep.subr.mxu0 0.0
        %1194 = vmatpush1.msra.mxu0 0.0
        %1195 = vmatprep.subr.mxu0 0.0
        %1196 = vmatpush1.msra.mxu0 0.0
        %1197 = vmatprep.subr.mxu0 0.0
        %1198 = vmatpush1.msra.mxu0 0.0
        %1199 = vmatprep.subr.mxu0 0.0
        %1200 = vmatpush1.msra.mxu0 0.0
        %1201 = vmatprep.subr.mxu0 0.0
        %1202 = vmatpush1.msra.mxu0 0.0
        %1203 = vmatprep.subr.mxu0 0.0
        %1204 = vmatpush1.msra.mxu0 0.0
        %1205 = vmatprep.subr.mxu0 0.0
        %1206 = vmatpush1.msra.mxu0 0.0
        %1207 = vmatprep.subr.mxu0 0.0
        %1208 = vmatpush1.msra.mxu0 0.0
        %1209 = vmatprep.subr.mxu0 0.0
        %1210 = vmatpush1.msra.mxu0 0.0
        %1211 = vmatprep.subr.mxu0 0.0
        %1212 = vmatpush1.msra.mxu0 0.0
        %1213 = vmatprep.subr.mxu0 0.0
        %1214 = vmatpush1.msra.mxu0 0.0
        %1215 = vmatprep.subr.mxu0 0.0
        %1216 = vmatpush1.msra.mxu0 0.0
        %1217 = vmatprep.subr.mxu0 0.0
        %1218 = vmatpush1.msra.mxu0 0.0
        %1219 = vmatprep.subr.mxu0 0.0
        %1220 = vmatpush1.msra.mxu0 0.0
        %1221 = vmatprep.subr.mxu0 0.0
        %1222 = vmatpush1.msra.mxu0 0.0
        %1223 = vmatprep.subr.mxu0 0.0
        %1224 = vmatpush1.msra.mxu0 0.0
        %1225 = vmatprep.subr.mxu0 0.0
        %1226 = vmatpush1.msra.mxu0 0.0
        %1227 = vmatprep.subr.mxu0 0.0
        %1228 = vmatpush1.msra.mxu0 0.0
        %1229 = vmatprep.subr.mxu0 0.0
        %1230 = vmatpush1.msra.mxu0 0.0
        %1231 = vmatprep.subr.mxu0 0.0
        %1232 = vmatpush1.msra.mxu0 0.0
        %1233 = vmatprep.subr.mxu0 0.0
        %1234 = vmatpush1.msra.mxu0 0.0
        %1235 = vmatprep.subr.mxu0 0.0
        %1236 = vmatpush1.msra.mxu0 0.0
        %1237 = vmatprep.subr.mxu0 0.0
        %1238 = vmatpush1.msra.mxu0 0.0
        %1239 = vmatprep.subr.mxu0 0.0
        %1240 = vmatpush1.msra.mxu0 0.0
        %1241 = vmatprep.subr.mxu0 0.0
        %1242 = vmatpush1.msra.mxu0 0.0
        %1243 = vmatprep.subr.mxu0 0.0
        %1244 = vmatpush1.msra.mxu0 0.0
        %1245 = vmatprep.subr.mxu0 0.0
        %1246 = vmatpush1.msra.mxu0 0.0
        %1247 = vmatprep.mubr.f32.mxu0 0.0
        %1248 = vmatmul.mubr.f32.gmra.mrb[0].mxu0 %v259
        %v1249 = vpop.f32.mrb[0].mxu0
        %v1250 = vadd.f32 0.0, %v1249
        %v1251 = vpop.f32.mrb[0].mxu0
        %1252 = vdwg.mxu0
        %s1253 = scalar_lea.vmem %s2, 64
        %v1254 = vld [vmem:[%s1253] sm:$0xff]
        %v1255 = vld [vmem:[%s1253 + $0x8] sm:$0xff]
        %v1256 = vld [vmem:[%s1253 + $0x10] sm:$0xff]
        %v1257 = vld [vmem:[%s1253 + $0x18] sm:$0xff]
        %1258 = vmatprep.subr.mxu0 0.0
        %1259 = vmatpush1.msra.mxu0 %v1254
        %1260 = vmatprep.subr.mxu0 0.0
        %1261 = vmatpush1.msra.mxu0 %v1255
        %1262 = vmatprep.subr.mxu0 0.0
        %1263 = vmatpush1.msra.mxu0 %v1256
        %1264 = vmatprep.subr.mxu0 0.0
        %1265 = vmatpush1.msra.mxu0 %v1257
        %1266 = vmatprep.subr.mxu0 0.0
        %1267 = vmatpush1.msra.mxu0 0.0
        %1268 = vmatprep.subr.mxu0 0.0
        %1269 = vmatpush1.msra.mxu0 0.0
        %1270 = vmatprep.subr.mxu0 0.0
        %1271 = vmatpush1.msra.mxu0 0.0
        %1272 = vmatprep.subr.mxu0 0.0
        %1273 = vmatpush1.msra.mxu0 0.0
        %1274 = vmatprep.subr.mxu0 0.0
        %1275 = vmatpush1.msra.mxu0 0.0
        %1276 = vmatprep.subr.mxu0 0.0
        %1277 = vmatpush1.msra.mxu0 0.0
        %1278 = vmatprep.subr.mxu0 0.0
        %1279 = vmatpush1.msra.mxu0 0.0
        %1280 = vmatprep.subr.mxu0 0.0
        %1281 = vmatpush1.msra.mxu0 0.0
        %1282 = vmatprep.subr.mxu0 0.0
        %1283 = vmatpush1.msra.mxu0 0.0
        %1284 = vmatprep.subr.mxu0 0.0
        %1285 = vmatpush1.msra.mxu0 0.0
        %1286 = vmatprep.subr.mxu0 0.0
        %1287 = vmatpush1.msra.mxu0 0.0
        %1288 = vmatprep.subr.mxu0 0.0
        %1289 = vmatpush1.msra.mxu0 0.0
        %1290 = vmatprep.subr.mxu0 0.0
        %1291 = vmatpush1.msra.mxu0 0.0
        %1292 = vmatprep.subr.mxu0 0.0
        %1293 = vmatpush1.msra.mxu0 0.0
        %1294 = vmatprep.subr.mxu0 0.0
        %1295 = vmatpush1.msra.mxu0 0.0
        %1296 = vmatprep.subr.mxu0 0.0
        %1297 = vmatpush1.msra.mxu0 0.0
        %1298 = vmatprep.subr.mxu0 0.0
        %1299 = vmatpush1.msra.mxu0 0.0
        %1300 = vmatprep.subr.mxu0 0.0
        %1301 = vmatpush1.msra.mxu0 0.0
        %1302 = vmatprep.subr.mxu0 0.0
        %1303 = vmatpush1.msra.mxu0 0.0
        %1304 = vmatprep.subr.mxu0 0.0
        %1305 = vmatpush1.msra.mxu0 0.0
        %1306 = vmatprep.subr.mxu0 0.0
        %1307 = vmatpush1.msra.mxu0 0.0
        %1308 = vmatprep.subr.mxu0 0.0
        %1309 = vmatpush1.msra.mxu0 0.0
        %1310 = vmatprep.subr.mxu0 0.0
        %1311 = vmatpush1.msra.mxu0 0.0
        %1312 = vmatprep.subr.mxu0 0.0
        %1313 = vmatpush1.msra.mxu0 0.0
        %1314 = vmatprep.subr.mxu0 0.0
        %1315 = vmatpush1.msra.mxu0 0.0
        %1316 = vmatprep.subr.mxu0 0.0
        %1317 = vmatpush1.msra.mxu0 0.0
        %1318 = vmatprep.subr.mxu0 0.0
        %1319 = vmatpush1.msra.mxu0 0.0
        %1320 = vmatprep.subr.mxu0 0.0
        %1321 = vmatpush1.msra.mxu0 0.0
        %1322 = vmatprep.mubr.f32.mxu0 0.0
        %1323 = vmatmul.mubr.f32.gmra.mrb[0].mxu0 %v259
        %v1324 = vpop.f32.mrb[0].mxu0
        %v1325 = vadd.f32 0.0, %v1324
        %v1326 = vpop.f32.mrb[0].mxu0
        %1327 = vdwg.mxu0
        %s1328 = scalar_lea.vmem %s3, 64
        %v1329 = vld [vmem:[%s1328] sm:$0xff]
        %v1330 = vld [vmem:[%s1328 + $0x8] sm:$0xff]
        %v1331 = vld [vmem:[%s1328 + $0x10] sm:$0xff]
        %v1332 = vld [vmem:[%s1328 + $0x18] sm:$0xff]
        %1333 = vmatprep.subr.mxu0 0.0
        %1334 = vmatpush1.msra.mxu0 %v1329
        %1335 = vmatprep.subr.mxu0 0.0
        %1336 = vmatpush1.msra.mxu0 %v1330
        %1337 = vmatprep.subr.mxu0 0.0
        %1338 = vmatpush1.msra.mxu0 %v1331
        %1339 = vmatprep.subr.mxu0 0.0
        %1340 = vmatpush1.msra.mxu0 %v1332
        %1341 = vmatprep.subr.mxu0 0.0
        %1342 = vmatpush1.msra.mxu0 0.0
        %1343 = vmatprep.subr.mxu0 0.0
        %1344 = vmatpush1.msra.mxu0 0.0
        %1345 = vmatprep.subr.mxu0 0.0
        %1346 = vmatpush1.msra.mxu0 0.0
        %1347 = vmatprep.subr.mxu0 0.0
        %1348 = vmatpush1.msra.mxu0 0.0
        %1349 = vmatprep.subr.mxu0 0.0
        %1350 = vmatpush1.msra.mxu0 0.0
        %1351 = vmatprep.subr.mxu0 0.0
        %1352 = vmatpush1.msra.mxu0 0.0
        %1353 = vmatprep.subr.mxu0 0.0
        %1354 = vmatpush1.msra.mxu0 0.0
        %1355 = vmatprep.subr.mxu0 0.0
        %1356 = vmatpush1.msra.mxu0 0.0
        %1357 = vmatprep.subr.mxu0 0.0
        %1358 = vmatpush1.msra.mxu0 0.0
        %1359 = vmatprep.subr.mxu0 0.0
        %1360 = vmatpush1.msra.mxu0 0.0
        %1361 = vmatprep.subr.mxu0 0.0
        %1362 = vmatpush1.msra.mxu0 0.0
        %1363 = vmatprep.subr.mxu0 0.0
        %1364 = vmatpush1.msra.mxu0 0.0
        %1365 = vmatprep.subr.mxu0 0.0
        %1366 = vmatpush1.msra.mxu0 0.0
        %1367 = vmatprep.subr.mxu0 0.0
        %1368 = vmatpush1.msra.mxu0 0.0
        %1369 = vmatprep.subr.mxu0 0.0
        %1370 = vmatpush1.msra.mxu0 0.0
        %1371 = vmatprep.subr.mxu0 0.0
        %1372 = vmatpush1.msra.mxu0 0.0
        %1373 = vmatprep.subr.mxu0 0.0
        %1374 = vmatpush1.msra.mxu0 0.0
        %1375 = vmatprep.subr.mxu0 0.0
        %1376 = vmatpush1.msra.mxu0 0.0
        %1377 = vmatprep.subr.mxu0 0.0
        %1378 = vmatpush1.msra.mxu0 0.0
        %1379 = vmatprep.subr.mxu0 0.0
        %1380 = vmatpush1.msra.mxu0 0.0
        %1381 = vmatprep.subr.mxu0 0.0
        %1382 = vmatpush1.msra.mxu0 0.0
        %1383 = vmatprep.subr.mxu0 0.0
        %1384 = vmatpush1.msra.mxu0 0.0
        %1385 = vmatprep.subr.mxu0 0.0
        %1386 = vmatpush1.msra.mxu0 0.0
        %1387 = vmatprep.subr.mxu0 0.0
        %1388 = vmatpush1.msra.mxu0 0.0
        %1389 = vmatprep.subr.mxu0 0.0
        %1390 = vmatpush1.msra.mxu0 0.0
        %1391 = vmatprep.subr.mxu0 0.0
        %1392 = vmatpush1.msra.mxu0 0.0
        %1393 = vmatprep.subr.mxu0 0.0
        %1394 = vmatpush1.msra.mxu0 0.0
        %1395 = vmatprep.subr.mxu0 0.0
        %1396 = vmatpush1.msra.mxu0 0.0
        %1397 = vmatprep.mubr.f32.mxu0 0.0
        %1398 = vmatmul.mubr.f32.gmra.mrb[0].mxu0 %v259
        %v1399 = vpop.f32.mrb[0].mxu0
        %v1400 = vadd.f32 0.0, %v1399
        %v1401 = vpop.f32.mrb[0].mxu0
        %1402 = vdwg.mxu0
        %v1404 = vsel %vm479, %v1250, 0
        %v1407 = vsel %vm479, %v1325, 0
        %1409 = vmatprep.subr.mxu0 0.0
        %1410 = vmatpush1.xpose.msra.mxu0 %v1407
        %1411 = vmatprep.subr.mxu0 0.0
        %1412 = vmatpush1.xpose.msra.mxu0 0.0
        %1413 = vmatprep.subr.mxu0 0.0
        %1414 = vmatpush1.xpose.msra.mxu0 0.0
        %1415 = vmatprep.subr.mxu0 0.0
        %1416 = vmatpush1.xpose.msra.mxu0 0.0
        %1417 = vmatprep.subr.mxu0 0.0
        %1418 = vmatpush1.xpose.msra.mxu0 0.0
        %1419 = vmatprep.subr.mxu0 0.0
        %1420 = vmatpush1.xpose.msra.mxu0 0.0
        %1421 = vmatprep.subr.mxu0 0.0
        %1422 = vmatpush1.xpose.msra.mxu0 0.0
        %1423 = vmatprep.subr.mxu0 0.0
        %1424 = vmatpush1.xpose.msra.mxu0 0.0
        %1425 = vmatprep.subr.mxu0 0.0
        %1426 = vmatpush1.xpose.msra.mxu0 0.0
        %1427 = vmatprep.subr.mxu0 0.0
        %1428 = vmatpush1.xpose.msra.mxu0 0.0
        %1429 = vmatprep.subr.mxu0 0.0
        %1430 = vmatpush1.xpose.msra.mxu0 0.0
        %1431 = vmatprep.subr.mxu0 0.0
        %1432 = vmatpush1.xpose.msra.mxu0 0.0
        %1433 = vmatprep.subr.mxu0 0.0
        %1434 = vmatpush1.xpose.msra.mxu0 0.0
        %1435 = vmatprep.subr.mxu0 0.0
        %1436 = vmatpush1.xpose.msra.mxu0 0.0
        %1437 = vmatprep.subr.mxu0 0.0
        %1438 = vmatpush1.xpose.msra.mxu0 0.0
        %1439 = vmatprep.subr.mxu0 0.0
        %1440 = vmatpush1.xpose.msra.mxu0 0.0
        %1441 = vmatprep.subr.mxu0 0.0
        %1442 = vmatpush1.xpose.msra.mxu0 0.0
        %1443 = vmatprep.subr.mxu0 0.0
        %1444 = vmatpush1.xpose.msra.mxu0 0.0
        %1445 = vmatprep.subr.mxu0 0.0
        %1446 = vmatpush1.xpose.msra.mxu0 0.0
        %1447 = vmatprep.subr.mxu0 0.0
        %1448 = vmatpush1.xpose.msra.mxu0 0.0
        %1449 = vmatprep.subr.mxu0 0.0
        %1450 = vmatpush1.xpose.msra.mxu0 0.0
        %1451 = vmatprep.subr.mxu0 0.0
        %1452 = vmatpush1.xpose.msra.mxu0 0.0
        %1453 = vmatprep.subr.mxu0 0.0
        %1454 = vmatpush1.xpose.msra.mxu0 0.0
        %1455 = vmatprep.subr.mxu0 0.0
        %1456 = vmatpush1.xpose.msra.mxu0 0.0
        %1457 = vmatprep.subr.mxu0 0.0
        %1458 = vmatpush1.xpose.msra.mxu0 0.0
        %1459 = vmatprep.subr.mxu0 0.0
        %1460 = vmatpush1.xpose.msra.mxu0 0.0
        %1461 = vmatprep.subr.mxu0 0.0
        %1462 = vmatpush1.xpose.msra.mxu0 0.0
        %1463 = vmatprep.subr.mxu0 0.0
        %1464 = vmatpush1.xpose.msra.mxu0 0.0
        %1465 = vmatprep.subr.mxu0 0.0
        %1466 = vmatpush1.xpose.msra.mxu0 0.0
        %1467 = vmatprep.subr.mxu0 0.0
        %1468 = vmatpush1.xpose.msra.mxu0 0.0
        %1469 = vmatprep.subr.mxu0 0.0
        %1470 = vmatpush1.xpose.msra.mxu0 0.0
        %1471 = vmatprep.subr.mxu0 0.0
        %1472 = vmatpush1.xpose.msra.mxu0 0.0
        %1473 = vmatprep.mubr.f32.mxu0 0.0
        %1474 = vmatmul.mubr.f32.gmra.mrb[0].mxu0 %v1404
        %v1475 = vpop.f32.mrb[0].mxu0
        %v1476 = vadd.f32 0.0, %v1475
        %v1477 = vpop.f32.mrb[0].mxu0
        %1478 = vdwg.mxu0
        %v1479 = vmul.f32 %v1476, 0.35355338
        %v1480 = vsel %vm252, -inf, %v1479
        %v1481 = vsel %vm479, %v1480, -inf
        %1482 = vmax.xlane.f32.xlu0 %v1481
        %v1483 = vpop.xlane.xlu0 %1482
        %v1484 = vsub.f32 %v1480, %v1483
        %v1485 = vmul.f32 %v1484, 1.442695
        %v1486 = vpow.pop %v1485
        %v1487 = vsel %vm479, %v1486, 0.0
        %1488 = vadd.xlane.f32.xlu0 %v1487
        %v1489 = vpop.xlane.xlu0 %1488
        %v1490 = vrcp.pop %v1489
        %v1491 = vmul.f32 %v1486, %v1490
        %v1493 = vsel %vm479, %v1491, 0
        %1495 = vmatprep.subr.mxu0 0.0
        %1496 = vmatpush1.msra.mxu0 %v1400
        %1497 = vmatprep.subr.mxu0 0.0
        %1498 = vmatpush1.msra.mxu0 0.0
        %1499 = vmatprep.subr.mxu0 0.0
        %1500 = vmatpush1.msra.mxu0 0.0
        %1501 = vmatprep.subr.mxu0 0.0
        %1502 = vmatpush1.msra.mxu0 0.0
        %1503 = vmatprep.subr.mxu0 0.0
        %1504 = vmatpush1.msra.mxu0 0.0
        %1505 = vmatprep.subr.mxu0 0.0
        %1506 = vmatpush1.msra.mxu0 0.0
        %1507 = vmatprep.subr.mxu0 0.0
        %1508 = vmatpush1.msra.mxu0 0.0
        %1509 = vmatprep.subr.mxu0 0.0
        %1510 = vmatpush1.msra.mxu0 0.0
        %1511 = vmatprep.subr.mxu0 0.0
        %1512 = vmatpush1.msra.mxu0 0.0
        %1513 = vmatprep.subr.mxu0 0.0
        %1514 = vmatpush1.msra.mxu0 0.0
        %1515 = vmatprep.subr.mxu0 0.0
        %1516 = vmatpush1.msra.mxu0 0.0
        %1517 = vmatprep.subr.mxu0 0.0
        %1518 = vmatpush1.msra.mxu0 0.0
        %1519 = vmatprep.subr.mxu0 0.0
        %1520 = vmatpush1.msra.mxu0 0.0
        %1521 = vmatprep.subr.mxu0 0.0
        %1522 = vmatpush1.msra.mxu0 0.0
        %1523 = vmatprep.subr.mxu0 0.0
        %1524 = vmatpush1.msra.mxu0 0.0
        %1525 = vmatprep.subr.mxu0 0.0
        %1526 = vmatpush1.msra.mxu0 0.0
        %1527 = vmatprep.subr.mxu0 0.0
        %1528 = vmatpush1.msra.mxu0 0.0
        %1529 = vmatprep.subr.mxu0 0.0
        %1530 = vmatpush1.msra.mxu0 0.0
        %1531 = vmatprep.subr.mxu0 0.0
        %1532 = vmatpush1.msra.mxu0 0.0
        %1533 = vmatprep.subr.mxu0 0.0
        %1534 = vmatpush1.msra.mxu0 0.0
        %1535 = vmatprep.subr.mxu0 0.0
        %1536 = vmatpush1.msra.mxu0 0.0
        %1537 = vmatprep.subr.mxu0 0.0
        %1538 = vmatpush1.msra.mxu0 0.0
        %1539 = vmatprep.subr.mxu0 0.0
        %1540 = vmatpush1.msra.mxu0 0.0
        %1541 = vmatprep.subr.mxu0 0.0
        %1542 = vmatpush1.msra.mxu0 0.0
        %1543 = vmatprep.subr.mxu0 0.0
        %1544 = vmatpush1.msra.mxu0 0.0
        %1545 = vmatprep.subr.mxu0 0.0
        %1546 = vmatpush1.msra.mxu0 0.0
        %1547 = vmatprep.subr.mxu0 0.0
        %1548 = vmatpush1.msra.mxu0 0.0
        %1549 = vmatprep.subr.mxu0 0.0
        %1550 = vmatpush1.msra.mxu0 0.0
        %1551 = vmatprep.subr.mxu0 0.0
        %1552 = vmatpush1.msra.mxu0 0.0
        %1553 = vmatprep.subr.mxu0 0.0
        %1554 = vmatpush1.msra.mxu0 0.0
        %1555 = vmatprep.subr.mxu0 0.0
        %1556 = vmatpush1.msra.mxu0 0.0
        %1557 = vmatprep.subr.mxu0 0.0
        %1558 = vmatpush1.msra.mxu0 0.0
        %1559 = vmatprep.mubr.f32.mxu0 0.0
        %1560 = vmatmul.mubr.f32.gmra.mrb[0].mxu0 %v1493
        %v1561 = vpop.f32.mrb[0].mxu0
        %v1562 = vadd.f32 0.0, %v1561
        %v1563 = vpop.f32.mrb[0].mxu0
        %1564 = vdwg.mxu0
        %s1565 = scalar_lea.vmem %s4, 16
        %v1566 = vld [vmem:[%s1565] sm:$0xff]
        %v1568 = vsel %vm479, %v1562, 0
        %1570 = vmatprep.subr.mxu0 0.0
        %1571 = vmatpush1.msra.mxu0 %v1566
        %1572 = vmatprep.subr.mxu0 0.0
        %1573 = vmatpush1.msra.mxu0 0.0
        %1574 = vmatprep.subr.mxu0 0.0
        %1575 = vmatpush1.msra.mxu0 0.0
        %1576 = vmatprep.subr.mxu0 0.0
        %1577 = vmatpush1.msra.mxu0 0.0
        %1578 = vmatprep.subr.mxu0 0.0
        %1579 = vmatpush1.msra.mxu0 0.0
        %1580 = vmatprep.subr.mxu0 0.0
        %1581 = vmatpush1.msra.mxu0 0.0
        %1582 = vmatprep.subr.mxu0 0.0
        %1583 = vmatpush1.msra.mxu0 0.0
        %1584 = vmatprep.subr.mxu0 0.0
        %1585 = vmatpush1.msra.mxu0 0.0
        %1586 = vmatprep.subr.mxu0 0.0
        %1587 = vmatpush1.msra.mxu0 0.0
        %1588 = vmatprep.subr.mxu0 0.0
        %1589 = vmatpush1.msra.mxu0 0.0
        %1590 = vmatprep.subr.mxu0 0.0
        %1591 = vmatpush1.msra.mxu0 0.0
        %1592 = vmatprep.subr.mxu0 0.0
        %1593 = vmatpush1.msra.mxu0 0.0
        %1594 = vmatprep.subr.mxu0 0.0
        %1595 = vmatpush1.msra.mxu0 0.0
        %1596 = vmatprep.subr.mxu0 0.0
        %1597 = vmatpush1.msra.mxu0 0.0
        %1598 = vmatprep.subr.mxu0 0.0
        %1599 = vmatpush1.msra.mxu0 0.0
        %1600 = vmatprep.subr.mxu0 0.0
        %1601 = vmatpush1.msra.mxu0 0.0
        %1602 = vmatprep.subr.mxu0 0.0
        %1603 = vmatpush1.msra.mxu0 0.0
        %1604 = vmatprep.subr.mxu0 0.0
        %1605 = vmatpush1.msra.mxu0 0.0
        %1606 = vmatprep.subr.mxu0 0.0
        %1607 = vmatpush1.msra.mxu0 0.0
        %1608 = vmatprep.subr.mxu0 0.0
        %1609 = vmatpush1.msra.mxu0 0.0
        %1610 = vmatprep.subr.mxu0 0.0
        %1611 = vmatpush1.msra.mxu0 0.0
        %1612 = vmatprep.subr.mxu0 0.0
        %1613 = vmatpush1.msra.mxu0 0.0
        %1614 = vmatprep.subr.mxu0 0.0
        %1615 = vmatpush1.msra.mxu0 0.0
        %1616 = vmatprep.subr.mxu0 0.0
        %1617 = vmatpush1.msra.mxu0 0.0
        %1618 = vmatprep.subr.mxu0 0.0
        %1619 = vmatpush1.msra.mxu0 0.0
        %1620 = vmatprep.subr.mxu0 0.0
        %1621 = vmatpush1.msra.mxu0 0.0
        %1622 = vmatprep.subr.mxu0 0.0
        %1623 = vmatpush1.msra.mxu0 0.0
        %1624 = vmatprep.subr.mxu0 0.0
        %1625 = vmatpush1.msra.mxu0 0.0
        %1626 = vmatprep.subr.mxu0 0.0
        %1627 = vmatpush1.msra.mxu0 0.0
        %1628 = vmatprep.subr.mxu0 0.0
        %1629 = vmatpush1.msra.mxu0 0.0
        %1630 = vmatprep.subr.mxu0 0.0
        %1631 = vmatpush1.msra.mxu0 0.0
        %1632 = vmatprep.subr.mxu0 0.0
        %1633 = vmatpush1.msra.mxu0 0.0
        %1634 = vmatprep.mubr.f32.mxu0 0.0
        %1635 = vmatmul.mubr.f32.gmra.mrb[0].mxu0 %v1568
        %v1636 = vpop.f32.mrb[0].mxu0
        %v1637 = vadd.f32 0.0, %v1636
        %v1638 = vpop.f32.mrb[0].mxu0
        %1639 = vdwg.mxu0
        %v1640 = vadd.f32 %v1175, %v1637
        %s1641 = scalar_lea.vmem %s1, 96
        %v1642 = vld [vmem:[%s1641] sm:$0xff]
        %v1643 = vld [vmem:[%s1641 + $0x8] sm:$0xff]
        %v1644 = vld [vmem:[%s1641 + $0x10] sm:$0xff]
        %v1645 = vld [vmem:[%s1641 + $0x18] sm:$0xff]
        %1646 = vmatprep.subr.mxu0 0.0
        %1647 = vmatpush1.msra.mxu0 %v1642
        %1648 = vmatprep.subr.mxu0 0.0
        %1649 = vmatpush1.msra.mxu0 %v1643
        %1650 = vmatprep.subr.mxu0 0.0
        %1651 = vmatpush1.msra.mxu0 %v1644
        %1652 = vmatprep.subr.mxu0 0.0
        %1653 = vmatpush1.msra.mxu0 %v1645
        %1654 = vmatprep.subr.mxu0 0.0
        %1655 = vmatpush1.msra.mxu0 0.0
        %1656 = vmatprep.subr.mxu0 0.0
        %1657 = vmatpush1.msra.mxu0 0.0
        %1658 = vmatprep.subr.mxu0 0.0
        %1659 = vmatpush1.msra.mxu0 0.0
        %1660 = vmatprep.subr.mxu0 0.0
        %1661 = vmatpush1.msra.mxu0 0.0
        %1662 = vmatprep.subr.mxu0 0.0
        %1663 = vmatpush1.msra.mxu0 0.0
        %1664 = vmatprep.subr.mxu0 0.0
        %1665 = vmatpush1.msra.mxu0 0.0
        %1666 = vmatprep.subr.mxu0 0.0
        %1667 = vmatpush1.msra.mxu0 0.0
        %1668 = vmatprep.subr.mxu0 0.0
        %1669 = vmatpush1.msra.mxu0 0.0
        %1670 = vmatprep.subr.mxu0 0.0
        %1671 = vmatpush1.msra.mxu0 0.0
        %1672 = vmatprep.subr.mxu0 0.0
        %1673 = vmatpush1.msra.mxu0 0.0
        %1674 = vmatprep.subr.mxu0 0.0
        %1675 = vmatpush1.msra.mxu0 0.0
        %1676 = vmatprep.subr.mxu0 0.0
        %1677 = vmatpush1.msra.mxu0 0.0
        %1678 = vmatprep.subr.mxu0 0.0
        %1679 = vmatpush1.msra.mxu0 0.0
        %1680 = vmatprep.subr.mxu0 0.0
        %1681 = vmatpush1.msra.mxu0 0.0
        %1682 = vmatprep.subr.mxu0 0.0
        %1683 = vmatpush1.msra.mxu0 0.0
        %1684 = vmatprep.subr.mxu0 0.0
        %1685 = vmatpush1.msra.mxu0 0.0
        %1686 = vmatprep.subr.mxu0 0.0
        %1687 = vmatpush1.msra.mxu0 0.0
        %1688 = vmatprep.subr.mxu0 0.0
        %1689 = vmatpush1.msra.mxu0 0.0
        %1690 = vmatprep.subr.mxu0 0.0
        %1691 = vmatpush1.msra.mxu0 0.0
        %1692 = vmatprep.subr.mxu0 0.0
        %1693 = vmatpush1.msra.mxu0 0.0
        %1694 = vmatprep.subr.mxu0 0.0
        %1695 = vmatpush1.msra.mxu0 0.0
        %1696 = vmatprep.subr.mxu0 0.0
        %1697 = vmatpush1.msra.mxu0 0.0
        %1698 = vmatprep.subr.mxu0 0.0
        %1699 = vmatpush1.msra.mxu0 0.0
        %1700 = vmatprep.subr.mxu0 0.0
        %1701 = vmatpush1.msra.mxu0 0.0
        %1702 = vmatprep.subr.mxu0 0.0
        %1703 = vmatpush1.msra.mxu0 0.0
        %1704 = vmatprep.subr.mxu0 0.0
        %1705 = vmatpush1.msra.mxu0 0.0
        %1706 = vmatprep.subr.mxu0 0.0
        %1707 = vmatpush1.msra.mxu0 0.0
        %1708 = vmatprep.subr.mxu0 0.0
        %1709 = vmatpush1.msra.mxu0 0.0
        %1710 = vmatprep.mubr.f32.mxu0 0.0
        %1711 = vmatmul.mubr.f32.gmra.mrb[0].mxu0 %v259
        %v1712 = vpop.f32.mrb[0].mxu0
        %v1713 = vadd.f32 0.0, %v1712
        %v1714 = vpop.f32.mrb[0].mxu0
        %1715 = vdwg.mxu0
        %s1716 = scalar_lea.vmem %s2, 96
        %v1717 = vld [vmem:[%s1716] sm:$0xff]
        %v1718 = vld [vmem:[%s1716 + $0x8] sm:$0xff]
        %v1719 = vld [vmem:[%s1716 + $0x10] sm:$0xff]
        %v1720 = vld [vmem:[%s1716 + $0x18] sm:$0xff]
        %1721 = vmatprep.subr.mxu0 0.0
        %1722 = vmatpush1.msra.mxu0 %v1717
        %1723 = vmatprep.subr.mxu0 0.0
        %1724 = vmatpush1.msra.mxu0 %v1718
        %1725 = vmatprep.subr.mxu0 0.0
        %1726 = vmatpush1.msra.mxu0 %v1719
        %1727 = vmatprep.subr.mxu0 0.0
        %1728 = vmatpush1.msra.mxu0 %v1720
        %1729 = vmatprep.subr.mxu0 0.0
        %1730 = vmatpush1.msra.mxu0 0.0
        %1731 = vmatprep.subr.mxu0 0.0
        %1732 = vmatpush1.msra.mxu0 0.0
        %1733 = vmatprep.subr.mxu0 0.0
        %1734 = vmatpush1.msra.mxu0 0.0
        %1735 = vmatprep.subr.mxu0 0.0
        %1736 = vmatpush1.msra.mxu0 0.0
        %1737 = vmatprep.subr.mxu0 0.0
        %1738 = vmatpush1.msra.mxu0 0.0
        %1739 = vmatprep.subr.mxu0 0.0
        %1740 = vmatpush1.msra.mxu0 0.0
        %1741 = vmatprep.subr.mxu0 0.0
        %1742 = vmatpush1.msra.mxu0 0.0
        %1743 = vmatprep.subr.mxu0 0.0
        %1744 = vmatpush1.msra.mxu0 0.0
        %1745 = vmatprep.subr.mxu0 0.0
        %1746 = vmatpush1.msra.mxu0 0.0
        %1747 = vmatprep.subr.mxu0 0.0
        %1748 = vmatpush1.msra.mxu0 0.0
        %1749 = vmatprep.subr.mxu0 0.0
        %1750 = vmatpush1.msra.mxu0 0.0
        %1751 = vmatprep.subr.mxu0 0.0
        %1752 = vmatpush1.msra.mxu0 0.0
        %1753 = vmatprep.subr.mxu0 0.0
        %1754 = vmatpush1.msra.mxu0 0.0
        %1755 = vmatprep.subr.mxu0 0.0
        %1756 = vmatpush1.msra.mxu0 0.0
        %1757 = vmatprep.subr.mxu0 0.0
        %1758 = vmatpush1.msra.mxu0 0.0
        %1759 = vmatprep.subr.mxu0 0.0
        %1760 = vmatpush1.msra.mxu0 0.0
        %1761 = vmatprep.subr.mxu0 0.0
        %1762 = vmatpush1.msra.mxu0 0.0
        %1763 = vmatprep.subr.mxu0 0.0
        %1764 = vmatpush1.msra.mxu0 0.0
        %1765 = vmatprep.subr.mxu0 0.0
        %1766 = vmatpush1.msra.mxu0 0.0
        %1767 = vmatprep.subr.mxu0 0.0
        %1768 = vmatpush1.msra.mxu0 0.0
        %1769 = vmatprep.subr.mxu0 0.0
        %1770 = vmatpush1.msra.mxu0 0.0
        %1771 = vmatprep.subr.mxu0 0.0
        %1772 = vmatpush1.msra.mxu0 0.0
        %1773 = vmatprep.subr.mxu0 0.0
        %1774 = vmatpush1.msra.mxu0 0.0
        %1775 = vmatprep.subr.mxu0 0.0
        %1776 = vmatpush1.msra.mxu0 0.0
        %1777 = vmatprep.subr.mxu0 0.0
        %1778 = vmatpush1.msra.mxu0 0.0
        %1779 = vmatprep.subr.mxu0 0.0
        %1780 = vmatpush1.msra.mxu0 0.0
        %1781 = vmatprep.subr.mxu0 0.0
        %1782 = vmatpush1.msra.mxu0 0.0
        %1783 = vmatprep.subr.mxu0 0.0
        %1784 = vmatpush1.msra.mxu0 0.0
        %1785 = vmatprep.mubr.f32.mxu0 0.0
        %1786 = vmatmul.mubr.f32.gmra.mrb[0].mxu0 %v259
        %v1787 = vpop.f32.mrb[0].mxu0
        %v1788 = vadd.f32 0.0, %v1787
        %v1789 = vpop.f32.mrb[0].mxu0
        %1790 = vdwg.mxu0
        %s1791 = scalar_lea.vmem %s3, 96
        %v1792 = vld [vmem:[%s1791] sm:$0xff]
        %v1793 = vld [vmem:[%s1791 + $0x8] sm:$0xff]
        %v1794 = vld [vmem:[%s1791 + $0x10] sm:$0xff]
        %v1795 = vld [vmem:[%s1791 + $0x18] sm:$0xff]
        %1796 = vmatprep.subr.mxu0 0.0
        %1797 = vmatpush1.msra.mxu0 %v1792
        %1798 = vmatprep.subr.mxu0 0.0
        %1799 = vmatpush1.msra.mxu0 %v1793
        %1800 = vmatprep.subr.mxu0 0.0
        %1801 = vmatpush1.msra.mxu0 %v1794
        %1802 = vmatprep.subr.mxu0 0.0
        %1803 = vmatpush1.msra.mxu0 %v1795
        %1804 = vmatprep.subr.mxu0 0.0
        %1805 = vmatpush1.msra.mxu0 0.0
        %1806 = vmatprep.subr.mxu0 0.0
        %1807 = vmatpush1.msra.mxu0 0.0
        %1808 = vmatprep.subr.mxu0 0.0
        %1809 = vmatpush1.msra.mxu0 0.0
        %1810 = vmatprep.subr.mxu0 0.0
        %1811 = vmatpush1.msra.mxu0 0.0
        %1812 = vmatprep.subr.mxu0 0.0
        %1813 = vmatpush1.msra.mxu0 0.0
        %1814 = vmatprep.subr.mxu0 0.0
        %1815 = vmatpush1.msra.mxu0 0.0
        %1816 = vmatprep.subr.mxu0 0.0
        %1817 = vmatpush1.msra.mxu0 0.0
        %1818 = vmatprep.subr.mxu0 0.0
        %1819 = vmatpush1.msra.mxu0 0.0
        %1820 = vmatprep.subr.mxu0 0.0
        %1821 = vmatpush1.msra.mxu0 0.0
        %1822 = vmatprep.subr.mxu0 0.0
        %1823 = vmatpush1.msra.mxu0 0.0
        %1824 = vmatprep.subr.mxu0 0.0
        %1825 = vmatpush1.msra.mxu0 0.0
        %1826 = vmatprep.subr.mxu0 0.0
        %1827 = vmatpush1.msra.mxu0 0.0
        %1828 = vmatprep.subr.mxu0 0.0
        %1829 = vmatpush1.msra.mxu0 0.0
        %1830 = vmatprep.subr.mxu0 0.0
        %1831 = vmatpush1.msra.mxu0 0.0
        %1832 = vmatprep.subr.mxu0 0.0
        %1833 = vmatpush1.msra.mxu0 0.0
        %1834 = vmatprep.subr.mxu0 0.0
        %1835 = vmatpush1.msra.mxu0 0.0
        %1836 = vmatprep.subr.mxu0 0.0
        %1837 = vmatpush1.msra.mxu0 0.0
        %1838 = vmatprep.subr.mxu0 0.0
        %1839 = vmatpush1.msra.mxu0 0.0
        %1840 = vmatprep.subr.mxu0 0.0
        %1841 = vmatpush1.msra.mxu0 0.0
        %1842 = vmatprep.subr.mxu0 0.0
        %1843 = vmatpush1.msra.mxu0 0.0
        %1844 = vmatprep.subr.mxu0 0.0
        %1845 = vmatpush1.msra.mxu0 0.0
        %1846 = vmatprep.subr.mxu0 0.0
        %1847 = vmatpush1.msra.mxu0 0.0
        %1848 = vmatprep.subr.mxu0 0.0
        %1849 = vmatpush1.msra.mxu0 0.0
        %1850 = vmatprep.subr.mxu0 0.0
        %1851 = vmatpush1.msra.mxu0 0.0
        %1852 = vmatprep.subr.mxu0 0.0
        %1853 = vmatpush1.msra.mxu0 0.0
        %1854 = vmatprep.subr.mxu0 0.0
        %1855 = vmatpush1.msra.mxu0 0.0
        %1856 = vmatprep.subr.mxu0 0.0
        %1857 = vmatpush1.msra.mxu0 0.0
        %1858 = vmatprep.subr.mxu0 0.0
        %1859 = vmatpush1.msra.mxu0 0.0
        %1860 = vmatprep.mubr.f32.mxu0 0.0
        %1861 = vmatmul.mubr.f32.gmra.mrb[0].mxu0 %v259
        %v1862 = vpop.f32.mrb[0].mxu0
        %v1863 = vadd.f32 0.0, %v1862
        %v1864 = vpop.f32.mrb[0].mxu0
        %1865 = vdwg.mxu0
        %v1867 = vsel %vm479, %v1713, 0
        %v1870 = vsel %vm479, %v1788, 0
        %1872 = vmatprep.subr.mxu0 0.0
        %1873 = vmatpush1.xpose.msra.mxu0 %v1870
        %1874 = vmatprep.subr.mxu0 0.0
        %1875 = vmatpush1.xpose.msra.mxu0 0.0
        %1876 = vmatprep.subr.mxu0 0.0
        %1877 = vmatpush1.xpose.msra.mxu0 0.0
        %1878 = vmatprep.subr.mxu0 0.0
        %1879 = vmatpush1.xpose.msra.mxu0 0.0
        %1880 = vmatprep.subr.mxu0 0.0
        %1881 = vmatpush1.xpose.msra.mxu0 0.0
        %1882 = vmatprep.subr.mxu0 0.0
        %1883 = vmatpush1.xpose.msra.mxu0 0.0
        %1884 = vmatprep.subr.mxu0 0.0
        %1885 = vmatpush1.xpose.msra.mxu0 0.0
        %1886 = vmatprep.subr.mxu0 0.0
        %1887 = vmatpush1.xpose.msra.mxu0 0.0
        %1888 = vmatprep.subr.mxu0 0.0
        %1889 = vmatpush1.xpose.msra.mxu0 0.0
        %1890 = vmatprep.subr.mxu0 0.0
        %1891 = vmatpush1.xpose.msra.mxu0 0.0
        %1892 = vmatprep.subr.mxu0 0.0
        %1893 = vmatpush1.xpose.msra.mxu0 0.0
        %1894 = vmatprep.subr.mxu0 0.0
        %1895 = vmatpush1.xpose.msra.mxu0 0.0
        %1896 = vmatprep.subr.mxu0 0.0
        %1897 = vmatpush1.xpose.msra.mxu0 0.0
        %1898 = vmatprep.subr.mxu0 0.0
        %1899 = vmatpush1.xpose.msra.mxu0 0.0
        %1900 = vmatprep.subr.mxu0 0.0
        %1901 = vmatpush1.xpose.msra.mxu0 0.0
        %1902 = vmatprep.subr.mxu0 0.0
        %1903 = vmatpush1.xpose.msra.mxu0 0.0
        %1904 = vmatprep.subr.mxu0 0.0
        %1905 = vmatpush1.xpose.msra.mxu0 0.0
        %1906 = vmatprep.subr.mxu0 0.0
        %1907 = vmatpush1.xpose.msra.mxu0 0.0
        %1908 = vmatprep.subr.mxu0 0.0
        %1909 = vmatpush1.xpose.msra.mxu0 0.0
        %1910 = vmatprep.subr.mxu0 0.0
        %1911 = vmatpush1.xpose.msra.mxu0 0.0
        %1912 = vmatprep.subr.mxu0 0.0
        %1913 = vmatpush1.xpose.msra.mxu0 0.0
        %1914 = vmatprep.subr.mxu0 0.0
        %1915 = vmatpush1.xpose.msra.mxu0 0.0
        %1916 = vmatprep.subr.mxu0 0.0
        %1917 = vmatpush1.xpose.msra.mxu0 0.0
        %1918 = vmatprep.subr.mxu0 0.0
        %1919 = vmatpush1.xpose.msra.mxu0 0.0
        %1920 = vmatprep.subr.mxu0 0.0
        %1921 = vmatpush1.xpose.msra.mxu0 0.0
        %1922 = vmatprep.subr.mxu0 0.0
        %1923 = vmatpush1.xpose.msra.mxu0 0.0
        %1924 = vmatprep.subr.mxu0 0.0
        %1925 = vmatpush1.xpose.msra.mxu0 0.0
        %1926 = vmatprep.subr.mxu0 0.0
        %1927 = vmatpush1.xpose.msra.mxu0 0.0
        %1928 = vmatprep.subr.mxu0 0.0
        %1929 = vmatpush1.xpose.msra.mxu0 0.0
        %1930 = vmatprep.subr.mxu0 0.0
        %1931 = vmatpush1.xpose.msra.mxu0 0.0
        %1932 = vmatprep.subr.mxu0 0.0
        %1933 = vmatpush1.xpose.msra.mxu0 0.0
        %1934 = vmatprep.subr.mxu0 0.0
        %1935 = vmatpush1.xpose.msra.mxu0 0.0
        %1936 = vmatprep.mubr.f32.mxu0 0.0
        %1937 = vmatmul.mubr.f32.gmra.mrb[0].mxu0 %v1867
        %v1938 = vpop.f32.mrb[0].mxu0
        %v1939 = vadd.f32 0.0, %v1938
        %v1940 = vpop.f32.mrb[0].mxu0
        %1941 = vdwg.mxu0
        %v1942 = vmul.f32 %v1939, 0.35355338
        %v1943 = vsel %vm252, -inf, %v1942
        %v1944 = vsel %vm479, %v1943, -inf
        %1945 = vmax.xlane.f32.xlu0 %v1944
        %v1946 = vpop.xlane.xlu0 %1945
        %v1947 = vsub.f32 %v1943, %v1946
        %v1948 = vmul.f32 %v1947, 1.442695
        %v1949 = vpow.pop %v1948
        %v1950 = vsel %vm479, %v1949, 0.0
        %1951 = vadd.xlane.f32.xlu0 %v1950
        %v1952 = vpop.xlane.xlu0 %1951
        %v1953 = vrcp.pop %v1952
        %v1954 = vmul.f32 %v1949, %v1953
        %v1956 = vsel %vm479, %v1954, 0
        %1958 = vmatprep.subr.mxu0 0.0
        %1959 = vmatpush1.msra.mxu0 %v1863
        %1960 = vmatprep.subr.mxu0 0.0
        %1961 = vmatpush1.msra.mxu0 0.0
        %1962 = vmatprep.subr.mxu0 0.0
        %1963 = vmatpush1.msra.mxu0 0.0
        %1964 = vmatprep.subr.mxu0 0.0
        %1965 = vmatpush1.msra.mxu0 0.0
        %1966 = vmatprep.subr.mxu0 0.0
        %1967 = vmatpush1.msra.mxu0 0.0
        %1968 = vmatprep.subr.mxu0 0.0
        %1969 = vmatpush1.msra.mxu0 0.0
        %1970 = vmatprep.subr.mxu0 0.0
        %1971 = vmatpush1.msra.mxu0 0.0
        %1972 = vmatprep.subr.mxu0 0.0
        %1973 = vmatpush1.msra.mxu0 0.0
        %1974 = vmatprep.subr.mxu0 0.0
        %1975 = vmatpush1.msra.mxu0 0.0
        %1976 = vmatprep.subr.mxu0 0.0
        %1977 = vmatpush1.msra.mxu0 0.0
        %1978 = vmatprep.subr.mxu0 0.0
        %1979 = vmatpush1.msra.mxu0 0.0
        %1980 = vmatprep.subr.mxu0 0.0
        %1981 = vmatpush1.msra.mxu0 0.0
        %1982 = vmatprep.subr.mxu0 0.0
        %1983 = vmatpush1.msra.mxu0 0.0
        %1984 = vmatprep.subr.mxu0 0.0
        %1985 = vmatpush1.msra.mxu0 0.0
        %1986 = vmatprep.subr.mxu0 0.0
        %1987 = vmatpush1.msra.mxu0 0.0
        %1988 = vmatprep.subr.mxu0 0.0
        %1989 = vmatpush1.msra.mxu0 0.0
        %1990 = vmatprep.subr.mxu0 0.0
        %1991 = vmatpush1.msra.mxu0 0.0
        %1992 = vmatprep.subr.mxu0 0.0
        %1993 = vmatpush1.msra.mxu0 0.0
        %1994 = vmatprep.subr.mxu0 0.0
        %1995 = vmatpush1.msra.mxu0 0.0
        %1996 = vmatprep.subr.mxu0 0.0
        %1997 = vmatpush1.msra.mxu0 0.0
        %1998 = vmatprep.subr.mxu0 0.0
        %1999 = vmatpush1.msra.mxu0 0.0
        %2000 = vmatprep.subr.mxu0 0.0
        %2001 = vmatpush1.msra.mxu0 0.0
        %2002 = vmatprep.subr.mxu0 0.0
        %2003 = vmatpush1.msra.mxu0 0.0
        %2004 = vmatprep.subr.mxu0 0.0
        %2005 = vmatpush1.msra.mxu0 0.0
        %2006 = vmatprep.subr.mxu0 0.0
        %2007 = vmatpush1.msra.mxu0 0.0
        %2008 = vmatprep.subr.mxu0 0.0
        %2009 = vmatpush1.msra.mxu0 0.0
        %2010 = vmatprep.subr.mxu0 0.0
        %2011 = vmatpush1.msra.mxu0 0.0
        %2012 = vmatprep.subr.mxu0 0.0
        %2013 = vmatpush1.msra.mxu0 0.0
        %2014 = vmatprep.subr.mxu0 0.0
        %2015 = vmatpush1.msra.mxu0 0.0
        %2016 = vmatprep.subr.mxu0 0.0
        %2017 = vmatpush1.msra.mxu0 0.0
        %2018 = vmatprep.subr.mxu0 0.0
        %2019 = vmatpush1.msra.mxu0 0.0
        %2020 = vmatprep.subr.mxu0 0.0
        %2021 = vmatpush1.msra.mxu0 0.0
        %2022 = vmatprep.mubr.f32.mxu0 0.0
        %2023 = vmatmul.mubr.f32.gmra.mrb[0].mxu0 %v1956
        %v2024 = vpop.f32.mrb[0].mxu0
        %v2025 = vadd.f32 0.0, %v2024
        %v2026 = vpop.f32.mrb[0].mxu0
        %2027 = vdwg.mxu0
        %s2028 = scalar_lea.vmem %s4, 24
        %v2029 = vld [vmem:[%s2028] sm:$0xff]
        %v2031 = vsel %vm479, %v2025, 0
        %2033 = vmatprep.subr.mxu0 0.0
        %2034 = vmatpush1.msra.mxu0 %v2029
        %2035 = vmatprep.subr.mxu0 0.0
        %2036 = vmatpush1.msra.mxu0 0.0
        %2037 = vmatprep.subr.mxu0 0.0
        %2038 = vmatpush1.msra.mxu0 0.0
        %2039 = vmatprep.subr.mxu0 0.0
        %2040 = vmatpush1.msra.mxu0 0.0
        %2041 = vmatprep.subr.mxu0 0.0
        %2042 = vmatpush1.msra.mxu0 0.0
        %2043 = vmatprep.subr.mxu0 0.0
        %2044 = vmatpush1.msra.mxu0 0.0
        %2045 = vmatprep.subr.mxu0 0.0
        %2046 = vmatpush1.msra.mxu0 0.0
        %2047 = vmatprep.subr.mxu0 0.0
        %2048 = vmatpush1.msra.mxu0 0.0
        %2049 = vmatprep.subr.mxu0 0.0
        %2050 = vmatpush1.msra.mxu0 0.0
        %2051 = vmatprep.subr.mxu0 0.0
        %2052 = vmatpush1.msra.mxu0 0.0
        %2053 = vmatprep.subr.mxu0 0.0
        %2054 = vmatpush1.msra.mxu0 0.0
        %2055 = vmatprep.subr.mxu0 0.0
        %2056 = vmatpush1.msra.mxu0 0.0
        %2057 = vmatprep.subr.mxu0 0.0
        %2058 = vmatpush1.msra.mxu0 0.0
        %2059 = vmatprep.subr.mxu0 0.0
        %2060 = vmatpush1.msra.mxu0 0.0
        %2061 = vmatprep.subr.mxu0 0.0
        %2062 = vmatpush1.msra.mxu0 0.0
        %2063 = vmatprep.subr.mxu0 0.0
        %2064 = vmatpush1.msra.mxu0 0.0
        %2065 = vmatprep.subr.mxu0 0.0
        %2066 = vmatpush1.msra.mxu0 0.0
        %2067 = vmatprep.subr.mxu0 0.0
        %2068 = vmatpush1.msra.mxu0 0.0
        %2069 = vmatprep.subr.mxu0 0.0
        %2070 = vmatpush1.msra.mxu0 0.0
        %2071 = vmatprep.subr.mxu0 0.0
        %2072 = vmatpush1.msra.mxu0 0.0
        %2073 = vmatprep.subr.mxu0 0.0
        %2074 = vmatpush1.msra.mxu0 0.0
        %2075 = vmatprep.subr.mxu0 0.0
        %2076 = vmatpush1.msra.mxu0 0.0
        %2077 = vmatprep.subr.mxu0 0.0
        %2078 = vmatpush1.msra.mxu0 0.0
        %2079 = vmatprep.subr.mxu0 0.0
        %2080 = vmatpush1.msra.mxu0 0.0
        %2081 = vmatprep.subr.mxu0 0.0
        %2082 = vmatpush1.msra.mxu0 0.0
        %2083 = vmatprep.subr.mxu0 0.0
        %2084 = vmatpush1.msra.mxu0 0.0
        %2085 = vmatprep.subr.mxu0 0.0
        %2086 = vmatpush1.msra.mxu0 0.0
        %2087 = vmatprep.subr.mxu0 0.0
        %2088 = vmatpush1.msra.mxu0 0.0
        %2089 = vmatprep.subr.mxu0 0.0
        %2090 = vmatpush1.msra.mxu0 0.0
        %2091 = vmatprep.subr.mxu0 0.0
        %2092 = vmatpush1.msra.mxu0 0.0
        %2093 = vmatprep.subr.mxu0 0.0
        %2094 = vmatpush1.msra.mxu0 0.0
        %2095 = vmatprep.subr.mxu0 0.0
        %2096 = vmatpush1.msra.mxu0 0.0
        %2097 = vmatprep.mubr.f32.mxu0 0.0
        %2098 = vmatmul.mubr.f32.gmra.mrb[0].mxu0 %v2031
        %v2099 = vpop.f32.mrb[0].mxu0
        %v2100 = vadd.f32 0.0, %v2099
        %v2101 = vpop.f32.mrb[0].mxu0
        %2102 = vdwg.mxu0
        %v2103 = vadd.f32 %v1640, %v2100
        %v2104 = vld [vmem:[%s5] sm:$0x1]
        %v2106 = vlaneseq
        %v2107 = vshrl.u32 %v2106, 7
        %v2108 = vsub.s32 0, %v2107
        %v2109 = vrot.slane %v2104, %v2108
        %v2111 = vadd.f32 %v2103, %v2109
        %2112 = vst.msk [vmem:[%s242] sm:$0xff] %vm257, %v2111
        %s2113 = sand.u32 %s159, 1
        %s2114 = scalar_lea.sflag [#allocation3], %s2113
        %s2115 = sand.u32 %s159, 1
        %s2116 = smul.addr %s2115, 8
        %s2117 = scalar_lea.vmem [#allocation2], %s2116
        // Predicated region
        $region45: #{tpu_custom_call.1} parent=43 // pred_check
          %p2118 = pneg %p169
        $region46: #{tpu_custom_call.1} parent=43 // pred_check_branch
          %2120 = sbr.rel (%p2118) target = $region48
        $region47: #{tpu_custom_call.1} parent=43 // pred_region
          %s2122 = ssub.s32 128, 128
          %2123 = vsyncadd %s2114, %s2122
          %s2124 = smul.addr %s20, 128
          %s2125 = scalar_lea.hbm %s6, %s2124
          %s2127 = sshll.u32 %s2117, 4
          %s2128 = int_to_ptr.vmem [resolvable:$true] %s2127
          %2130 = dma.vmem_to_hbm [thread:$0]  %s2128, 128, %s2125, %s2114
        $region48: #{tpu_custom_call.1} parent=43 // pred_fallthru
          _
      $region44: #{tpu_custom_call.1} parent=5 // pred_fallthru
        _
      %p2131 = scmp.le.s32.totalorder 2, %s15
      // Predicated region
      $region49: #{tpu_custom_call.1} parent=5 // pred_check
        %p2132 = pneg %p2131
      $region50: #{tpu_custom_call.1} parent=5 // pred_check_branch
        %2134 = sbr.rel (%p2132) target = $region52
      $region51: #{tpu_custom_call.1} parent=5 // pred_region
        %s2135 = ssub.s32 %s15, 2
        // Predicated region
        $region53: #{tpu_custom_call.1} parent=51 // pred_check
          %p2136 = pneg %p175
        $region54: #{tpu_custom_call.1} parent=51 // pred_check_branch
          %2138 = sbr.rel (%p2136) target = $region56
        $region55: #{tpu_custom_call.1} parent=51 // pred_region
          %s2139 = sand.u32 %s160, 1
          %s2140 = scalar_lea.sflag [#allocation3], %s2139
          %s2141 = sand.u32 %s160, 1
          %s2142 = smul.addr %s2141, 8
          %s2143 = scalar_lea.vmem [#allocation2], %s2142
          %2144 = dma.done %s2140, 128
        $region56: #{tpu_custom_call.1} parent=51 // pred_fallthru
          _
      $region52: #{tpu_custom_call.1} parent=5 // pred_fallthru
        _
    $region6: #{tpu_custom_call.1} parent=1 // loop_footer
      %s19 = sadd.s32 1, %s15
    $region7: #{tpu_custom_call.1} parent=1 // loop_footer_branch
      %14 = sbr.rel target = $region3
    $region8: #{tpu_custom_call.1} parent=1 // loop_exit
      _
    %2145 = vsyncpa [#allocation3], 1
    %s2146 = scalar_lea.sflag [#allocation3], 1
    %2147 = vsyncpa %s2146, 1

</llo_original>
